<compile_context>
chip_gen: v6e
topology: v6e:2x2x1
jax: 0.10.0
libtpu: 0.0.40
codegen_flags: <defaults>
</compile_context>

<pallas_src>
import functools
import math

import jax
import jax.numpy as jnp
from jax.experimental import pallas as pl
from jax.experimental.pallas import tpu as pltpu


def _round_up(x, m):
    return ((x + m - 1) // m) * m


# -----------------------------------------------------------------------------
# Kernel: one batch tile of packed rows.
#   x_ref : (T, G*F_pad)   G batch elements interleaved per row (lane-dense)
#   w/b   : block-diagonal packed weights (in_width, out_width), bias (1, out_width)
#   out   : (T, G)         one scalar per batch element, in original order
# -----------------------------------------------------------------------------
def _qnet_kernel(x_ref, w1, b1, w2, b2, w3, b3, w4, b4, w5, b5, out_ref, *,
                 compute_dtype):
    h = x_ref[...].astype(compute_dtype)
    for w_ref, b_ref in ((w1, b1), (w2, b2), (w3, b3), (w4, b4)):
        y = jnp.dot(h, w_ref[...], preferred_element_type=jnp.float32) + b_ref[...]
        h = jnp.tanh(y.astype(compute_dtype))
    # Final Linear(9 -> 1), no activation.
    out_ref[...] = (jnp.dot(h, w5[...], preferred_element_type=jnp.float32)
                    + b5[...]).astype(out_ref.dtype)


def _pack_params(params, f_pad, g, compute_dtype):
    """Build block-diagonal packed weights so the packed (N/G, G*F) slab can be
    pushed through the MLP without any transpose.  Padded channels get zero
    weights/biases, so they stay exactly zero and never contaminate results."""
    packed = []
    s_in = f_pad
    n_layers = len(params)
    for li, (w, b) in enumerate(params):
        out_dim, in_dim = w.shape                     # PyTorch (out, in) layout
        s_out = 1 if li == n_layers - 1 else _round_up(out_dim, 8)
        wb = (jnp.zeros((s_in, s_out), jnp.float32)
              .at[:in_dim, :out_dim].set(w.T.astype(jnp.float32)))
        w_bd = jnp.kron(jnp.eye(g, dtype=jnp.float32), wb).astype(compute_dtype)
        bb = (jnp.zeros((s_out,), jnp.float32)
              .at[:out_dim].set(b.reshape(-1).astype(jnp.float32)))
        b_bd = jnp.tile(bb, g)[None, :]               # (1, g*s_out), f32
        packed.append((w_bd, b_bd))
        s_in = s_out
    return packed


def qnet_forward(x, params, *, target_tile_n=32768, compute_dtype=jnp.float32):
    """x: (N, nT+nM+1) float32 -> (1, N) float32  (== squeeze(-1).unsqueeze(0)).

    params: list of (W, b) with W shaped (out, in), b shaped (out,)
    (native PyTorch nn.Linear layout).

    target_tile_n: batch columns per grid step.  Default 32768 (~1 MiB of x,
    ~20 MiB total VMEM) is sized for v7x's 64 MiB VMEM; on v5e/v6e (128 MiB)
    it can be raised to 131072.
    """
    n, f = x.shape

    # Feature dim padded to a multiple of 8 so a small packing group exists.
    f_pad = _round_up(f, 8)
    g = 128 // math.gcd(128, f_pad)          # batch elems per packed row
    width_in = g * f_pad                     # multiple of 128 -> lane-dense

    # Batch padding: 1024-column granule only; tile divides the padded extent;
    # always >= 2 (even) grid tiles so v7x can use both TensorCores.
    UNIT = 1024
    n_units = pl.cdiv(max(n, 1), UNIT)
    num_tiles = max(2, pl.cdiv(n_units * UNIT, target_tile_n))
    num_tiles += num_tiles % 2
    tile_units = pl.cdiv(n_units, num_tiles)
    tile_n = tile_units * UNIT
    n_pad = num_tiles * tile_n
    tile_rows = tile_n // g
    rows_total = n_pad // g

    # Prologue: at most a cheap zero-pad (skipped when already aligned, as in
    # the demo); the reshape below is a contiguous->contiguous bitcast (free).
    if (f_pad != f) or (n_pad != n):
        xp = jnp.zeros((n_pad, f_pad), x.dtype).at[:n, :f].set(x)
    else:
        xp = x
    x_packed = xp.reshape(rows_total, width_in)

    packed = _pack_params(params, f_pad, g, compute_dtype)

    flat = [x_packed]
    in_specs = [pl.BlockSpec((tile_rows, width_in), lambda i: (i, 0))]
    for w_bd, b_bd in packed:
        flat += [w_bd, b_bd]
        # Full-array blocks, constant index_map -> fetched once, VMEM-resident.
        in_specs.append(pl.BlockSpec(w_bd.shape, lambda i: (0, 0)))
        in_specs.append(pl.BlockSpec(b_bd.shape, lambda i: (0, 0)))

    flops = 2 * rows_total * sum(int(w.shape[0]) * int(w.shape[1])
                                 for w, _ in packed)
    transcend = rows_total * sum(int(b.shape[1]) for _, b in packed[:-1])
    bytes_acc = (int(x_packed.size) * x_packed.dtype.itemsize
                 + rows_total * g * 4
                 + sum(int(w.size) * w.dtype.itemsize + int(b.size) * 4
                       for w, b in packed))

    out_packed = pl.pallas_call(
        functools.partial(_qnet_kernel, compute_dtype=compute_dtype),
        out_shape=jax.ShapeDtypeStruct((rows_total, g), jnp.float32),
        grid=(num_tiles,),
        in_specs=in_specs,
        out_specs=pl.BlockSpec((tile_rows, g), lambda i: (i, 0)),
        compiler_params=pltpu.CompilerParams(
            dimension_semantics=("parallel",),
            vmem_limit_bytes=48 * 1024 * 1024),
        cost_estimate=pl.CostEstimate(
            flops=flops, transcendentals=transcend, bytes_accessed=bytes_acc),
    )(*flat)

    # (rows, G) -> (N_pad,) is a contiguous bitcast; then drop padding.
    return out_packed.reshape(n_pad)[:n][None, :]


# -----------------------------------------------------------------------------
# Parameter init (mirrors the PyTorch module) and a plain-JAX reference.
# -----------------------------------------------------------------------------
def init_qnet_params(key, nT, nM):
    """xavier_normal_ weights in (out, in) layout, torch-default uniform biases."""
    in_dim = nT + nM + 1
    dims = [(in_dim, 3), (3, 9), (9, 18), (18, 9), (9, 1)]
    params = []
    for fan_in, fan_out in dims:
        key, kw, kb = jax.random.split(key, 3)
        std = math.sqrt(2.0 / (fan_in + fan_out))
        w = std * jax.random.normal(kw, (fan_out, fan_in), dtype=jnp.float32)
        bound = 1.0 / math.sqrt(fan_in)
        b = jax.random.uniform(kb, (fan_out,), dtype=jnp.float32,
                               minval=-bound, maxval=bound)
        params.append((w, b))
    return params


def qnet_reference(x, params):
    h = x
    for i, (w, b) in enumerate(params):
        h = jnp.dot(h, w.T, precision="highest") + b
        if i < 4:
            h = jnp.tanh(h)
    return h[:, 0][None, :]


if __name__ == "__main__":
    nT, nM = 4, 3                       # input feature dim = nT + nM + 1 = 8
    key = jax.random.PRNGKey(0)
    key, kx1, kx2 = jax.random.split(key, 3)
    params = init_qnet_params(key, nT, nM)

    fwd_f32 = jax.jit(functools.partial(qnet_forward, params=params))
    fwd_bf16 = jax.jit(functools.partial(qnet_forward, params=params,
                                         compute_dtype=jnp.bfloat16))

    # Main case: batch aligned so packing is a pure bitcast (zero prologue).
    n1 = 4096
    x1 = jax.random.normal(kx1, (n1, nT + nM + 1), dtype=jnp.float32)
    out1 = jax.block_until_ready(fwd_f32(x1))
    ref1 = qnet_reference(x1, params)
    assert out1.shape == (1, n1), out1.shape
    assert jnp.allclose(out1, ref1, atol=1e-4, rtol=1e-4)

    # Ragged batch exercises the (cheap, 1024-granule) padding path.
    n2 = 1000
    x2 = jax.random.normal(kx2, (n2, nT + nM + 1), dtype=jnp.float32)
    out2 = jax.block_until_ready(fwd_f32(x2))
    ref2 = qnet_reference(x2, params)
    assert out2.shape == (1, n2), out2.shape
    assert jnp.allclose(out2, ref2, atol=1e-4, rtol=1e-4)

    # bf16 compute path (MXU-native on v6e/v7x); loose tolerance vs f32 ref.
    out3 = jax.block_until_ready(fwd_bf16(x1))
    assert out3.shape == (1, n1), out3.shape
    assert jnp.allclose(out3, ref1, atol=1e-1, rtol=1e-1)

    print("KERNEL_OK")
</pallas_src>

<mosaic_0001>
module attributes {stable_mosaic.version = 11 : i64} {
  func.func @_qnet_kernel(%arg0: i32, %arg1: memref<128x128xf32, #tpu.memory_space<vmem>>, %arg2: memref<128x128xf32, #tpu.memory_space<vmem>>, %arg3: memref<1x128xf32, #tpu.memory_space<vmem>>, %arg4: memref<128x256xf32, #tpu.memory_space<vmem>>, %arg5: memref<1x256xf32, #tpu.memory_space<vmem>>, %arg6: memref<256x384xf32, #tpu.memory_space<vmem>>, %arg7: memref<1x384xf32, #tpu.memory_space<vmem>>, %arg8: memref<384x256xf32, #tpu.memory_space<vmem>>, %arg9: memref<1x256xf32, #tpu.memory_space<vmem>>, %arg10: memref<256x16xf32, #tpu.memory_space<vmem>>, %arg11: memref<1x16xf32, #tpu.memory_space<vmem>>, %arg12: memref<128x16xf32, #tpu.memory_space<vmem>>) attributes {dimension_semantics = [#tpu.dimension_semantics<parallel>], iteration_bounds = array<i64: 2>, scalar_prefetch = 0 : i64, scratch_operands = 0 : i64, tpu.core_type = #tpu.core_type<tc>, window_params = [{transform_indices = @transform_0, window_bounds = array<i64: 128, 128>}, {pipeline_mode = #tpu.pipeline_mode<synchronous>, transform_indices = @transform_1, window_bounds = array<i64: 128, 128>}, {pipeline_mode = #tpu.pipeline_mode<synchronous>, transform_indices = @transform_2, window_bounds = array<i64: 1, 128>}, {pipeline_mode = #tpu.pipeline_mode<synchronous>, transform_indices = @transform_3, window_bounds = array<i64: 128, 256>}, {pipeline_mode = #tpu.pipeline_mode<synchronous>, transform_indices = @transform_4, window_bounds = array<i64: 1, 256>}, {pipeline_mode = #tpu.pipeline_mode<synchronous>, transform_indices = @transform_5, window_bounds = array<i64: 256, 384>}, {pipeline_mode = #tpu.pipeline_mode<synchronous>, transform_indices = @transform_6, window_bounds = array<i64: 1, 384>}, {pipeline_mode = #tpu.pipeline_mode<synchronous>, transform_indices = @transform_7, window_bounds = array<i64: 384, 256>}, {pipeline_mode = #tpu.pipeline_mode<synchronous>, transform_indices = @transform_8, window_bounds = array<i64: 1, 256>}, {pipeline_mode = #tpu.pipeline_mode<synchronous>, transform_indices = @transform_9, window_bounds = array<i64: 256, 16>}, {pipeline_mode = #tpu.pipeline_mode<synchronous>, transform_indices = @transform_10, window_bounds = array<i64: 1, 16>}, {transform_indices = @transform_11, window_bounds = array<i64: 128, 16>}]} {
    %c0 = arith.constant 0 : index
    %c0_0 = arith.constant 0 : index
    %0 = vector.load %arg1[%c0, %c0_0] : memref<128x128xf32, #tpu.memory_space<vmem>>, vector<128x128xf32>
    %c0_1 = arith.constant 0 : index
    %c0_2 = arith.constant 0 : index
    %1 = vector.load %arg2[%c0_1, %c0_2] : memref<128x128xf32, #tpu.memory_space<vmem>>, vector<128x128xf32>
    %cst = arith.constant dense<0.000000e+00> : vector<128x128xf32>
    %2 = tpu.matmul %0, %1, %cst {dimension_numbers = #tpu.dot_dimension_numbers<[1], [0], [0], [1], [0, 0, 1, 1], [], []>} : vector<128x128xf32>, vector<128x128xf32>, vector<128x128xf32> -> vector<128x128xf32>
    %c0_3 = arith.constant 0 : index
    %c0_4 = arith.constant 0 : index
    %3 = vector.load %arg3[%c0_3, %c0_4] : memref<1x128xf32, #tpu.memory_space<vmem>>, vector<1x128xf32>
    %4 = vector.broadcast %3 : vector<1x128xf32> to vector<128x128xf32>
    %5 = arith.addf %2, %4 : vector<128x128xf32>
    %6 = math.tanh %5 : vector<128x128xf32>
    %c0_5 = arith.constant 0 : index
    %c0_6 = arith.constant 0 : index
    %7 = vector.load %arg4[%c0_5, %c0_6] : memref<128x256xf32, #tpu.memory_space<vmem>>, vector<128x256xf32>
    %cst_7 = arith.constant dense<0.000000e+00> : vector<128x256xf32>
    %8 = tpu.matmul %6, %7, %cst_7 {dimension_numbers = #tpu.dot_dimension_numbers<[1], [0], [0], [1], [0, 0, 1, 1], [], []>} : vector<128x128xf32>, vector<128x256xf32>, vector<128x256xf32> -> vector<128x256xf32>
    %c0_8 = arith.constant 0 : index
    %c0_9 = arith.constant 0 : index
    %9 = vector.load %arg5[%c0_8, %c0_9] : memref<1x256xf32, #tpu.memory_space<vmem>>, vector<1x256xf32>
    %10 = vector.broadcast %9 : vector<1x256xf32> to vector<128x256xf32>
    %11 = arith.addf %8, %10 : vector<128x256xf32>
    %12 = math.tanh %11 : vector<128x256xf32>
    %c0_10 = arith.constant 0 : index
    %c0_11 = arith.constant 0 : index
    %13 = vector.load %arg6[%c0_10, %c0_11] : memref<256x384xf32, #tpu.memory_space<vmem>>, vector<256x384xf32>
    %cst_12 = arith.constant dense<0.000000e+00> : vector<128x384xf32>
    %14 = tpu.matmul %12, %13, %cst_12 {dimension_numbers = #tpu.dot_dimension_numbers<[1], [0], [0], [1], [0, 0, 1, 1], [], []>} : vector<128x256xf32>, vector<256x384xf32>, vector<128x384xf32> -> vector<128x384xf32>
    %c0_13 = arith.constant 0 : index
    %c0_14 = arith.constant 0 : index
    %15 = vector.load %arg7[%c0_13, %c0_14] : memref<1x384xf32, #tpu.memory_space<vmem>>, vector<1x384xf32>
    %16 = vector.broadcast %15 : vector<1x384xf32> to vector<128x384xf32>
    %17 = arith.addf %14, %16 : vector<128x384xf32>
    %18 = math.tanh %17 : vector<128x384xf32>
    %c0_15 = arith.constant 0 : index
    %c0_16 = arith.constant 0 : index
    %19 = vector.load %arg8[%c0_15, %c0_16] : memref<384x256xf32, #tpu.memory_space<vmem>>, vector<384x256xf32>
    %cst_17 = arith.constant dense<0.000000e+00> : vector<128x256xf32>
    %20 = tpu.matmul %18, %19, %cst_17 {dimension_numbers = #tpu.dot_dimension_numbers<[1], [0], [0], [1], [0, 0, 1, 1], [], []>} : vector<128x384xf32>, vector<384x256xf32>, vector<128x256xf32> -> vector<128x256xf32>
    %c0_18 = arith.constant 0 : index
    %c0_19 = arith.constant 0 : index
    %21 = vector.load %arg9[%c0_18, %c0_19] : memref<1x256xf32, #tpu.memory_space<vmem>>, vector<1x256xf32>
    %22 = vector.broadcast %21 : vector<1x256xf32> to vector<128x256xf32>
    %23 = arith.addf %20, %22 : vector<128x256xf32>
    %24 = math.tanh %23 : vector<128x256xf32>
    %c0_20 = arith.constant 0 : index
    %c0_21 = arith.constant 0 : index
    %25 = vector.load %arg10[%c0_20, %c0_21] : memref<256x16xf32, #tpu.memory_space<vmem>>, vector<256x16xf32>
    %cst_22 = arith.constant dense<0.000000e+00> : vector<128x16xf32>
    %26 = tpu.matmul %24, %25, %cst_22 {dimension_numbers = #tpu.dot_dimension_numbers<[1], [0], [0], [1], [0, 0, 1, 1], [], []>} : vector<128x256xf32>, vector<256x16xf32>, vector<128x16xf32> -> vector<128x16xf32>
    %c0_23 = arith.constant 0 : index
    %c0_24 = arith.constant 0 : index
    %27 = vector.load %arg11[%c0_23, %c0_24] : memref<1x16xf32, #tpu.memory_space<vmem>>, vector<1x16xf32>
    %28 = vector.broadcast %27 : vector<1x16xf32> to vector<128x16xf32>
    %29 = arith.addf %26, %28 : vector<128x16xf32>
    %c0_25 = arith.constant 0 : index
    %c0_26 = arith.constant 0 : index
    %30 = vector.load %arg12[%c0_25, %c0_26] : memref<128x16xf32, #tpu.memory_space<vmem>>, vector<128x16xf32>
    tpu.vector_store %arg12[%c0_25, %c0_26], %29 {strides = array<i32>} : memref<128x16xf32, #tpu.memory_space<vmem>>, vector<128x16xf32>,
    return
  }
  func.func @transform_0(%arg0: i32) -> (i32, i32) {
    %c0_i32 = arith.constant 0 : i32
    %c0_i32_0 = arith.constant 0 : i32
    return %arg0, %c0_i32 : i32, i32
  }
  func.func @transform_1(%arg0: i32) -> (i32, i32) {
    %c0_i32 = arith.constant 0 : i32
    %c0_i32_0 = arith.constant 0 : i32
    %c0_i32_1 = arith.constant 0 : i32
    return %c0_i32, %c0_i32_0 : i32, i32
  }
  func.func @transform_2(%arg0: i32) -> (i32, i32) {
    %c0_i32 = arith.constant 0 : i32
    %c0_i32_0 = arith.constant 0 : i32
    %c0_i32_1 = arith.constant 0 : i32
    return %c0_i32, %c0_i32_0 : i32, i32
  }
  func.func @transform_3(%arg0: i32) -> (i32, i32) {
    %c0_i32 = arith.constant 0 : i32
    %c0_i32_0 = arith.constant 0 : i32
    %c0_i32_1 = arith.constant 0 : i32
    return %c0_i32, %c0_i32_0 : i32, i32
  }
  func.func @transform_4(%arg0: i32) -> (i32, i32) {
    %c0_i32 = arith.constant 0 : i32
    %c0_i32_0 = arith.constant 0 : i32
    %c0_i32_1 = arith.constant 0 : i32
    return %c0_i32, %c0_i32_0 : i32, i32
  }
  func.func @transform_5(%arg0: i32) -> (i32, i32) {
    %c0_i32 = arith.constant 0 : i32
    %c0_i32_0 = arith.constant 0 : i32
    %c0_i32_1 = arith.constant 0 : i32
    return %c0_i32, %c0_i32_0 : i32, i32
  }
  func.func @transform_6(%arg0: i32) -> (i32, i32) {
    %c0_i32 = arith.constant 0 : i32
    %c0_i32_0 = arith.constant 0 : i32
    %c0_i32_1 = arith.constant 0 : i32
    return %c0_i32, %c0_i32_0 : i32, i32
  }
  func.func @transform_7(%arg0: i32) -> (i32, i32) {
    %c0_i32 = arith.constant 0 : i32
    %c0_i32_0 = arith.constant 0 : i32
    %c0_i32_1 = arith.constant 0 : i32
    return %c0_i32, %c0_i32_0 : i32, i32
  }
  func.func @transform_8(%arg0: i32) -> (i32, i32) {
    %c0_i32 = arith.constant 0 : i32
    %c0_i32_0 = arith.constant 0 : i32
    %c0_i32_1 = arith.constant 0 : i32
    return %c0_i32, %c0_i32_0 : i32, i32
  }
  func.func @transform_9(%arg0: i32) -> (i32, i32) {
    %c0_i32 = arith.constant 0 : i32
    %c0_i32_0 = arith.constant 0 : i32
    %c0_i32_1 = arith.constant 0 : i32
    return %c0_i32, %c0_i32_0 : i32, i32
  }
  func.func @transform_10(%arg0: i32) -> (i32, i32) {
    %c0_i32 = arith.constant 0 : i32
    %c0_i32_0 = arith.constant 0 : i32
    %c0_i32_1 = arith.constant 0 : i32
    return %c0_i32, %c0_i32_0 : i32, i32
  }
  func.func @transform_11(%arg0: i32) -> (i32, i32) {
    %c0_i32 = arith.constant 0 : i32
    %c0_i32_0 = arith.constant 0 : i32
    return %arg0, %c0_i32 : i32, i32
  }
}

</mosaic_0001>

<llo_original>
// kernel: tile.28
$region0: #{tile.28}
  #allocation0 [shape = 's32[1]{0}', space=sflag, size = 0x4, scoped, tag = 'scoped memory for tile.28']
  %s0 = inlined_call_operand.vmem [shape: f32[8], index: 0, kind: input, shape index: {}]
  %s1 = inlined_call_operand.vmem [shape: f32[16,8], index: 1, kind: output, shape index: {}]
  // Predicated region
  $region2: #{tile.28} parent=0 // pred_check
    _
  $region3: #{tile.28} parent=0 // pred_check_branch
    %3 = sbr.rel (0) target = $region5
  $region4: #{tile.28} parent=0 // pred_region
    _
  $region5: #{tile.28} parent=0 // pred_fallthru
    _
  %v4 = vld [vmem:[%s0] ss:$0 sm:$0xff]
  %5 = vst [vmem:[%s1] sm:$0xff] %v4
  %s6 = scalar_lea.vmem %s1, 8
  %7 = vst [vmem:[%s6] sm:$0xff] %v4

// kernel: tile.29
$region0: #{tile.29}
  %s0 = inlined_call_operand.vmem [shape: f32[16,8], index: 0, kind: input, shape index: {}]
  %s1 = inlined_call_operand.vmem [shape: f32[1,128], index: 1, kind: output, shape index: {}]
  $region1: #{tile.29} parent=0
    #allocation0 [shape = 'u8[4096]{0}', space=vmem, size = 0x1000, scoped, tag = 'scoped mem for output reshape']
    %v2 = vld [vmem:[%s0] sm:$0x1]
    %vm3 = vcmask 64512
    %4 = vst.msk [vmem:[#allocation0] sm:$0x1] %vm3, %v2
    %s5 = scalar_lea.vmem %s0, 15
    %v6 = vld [vmem:[%s5] sm:$0x1]
    %7 = vrot.lane.b32.xlu0 %v6, 120
    %v8 = vpop.permute.xlu0 %7
    %vm9 = vcmask 1048512
    %10 = vst.msk [vmem:[#allocation0] sm:$0x1] %vm9, %v8
    %s11 = scalar_lea.vmem %s0, 14
    %v12 = vld [vmem:[%s11] sm:$0x1]
    %13 = vrot.lane.b32.xlu0 %v12, 112
    %v14 = vpop.permute.xlu0 %13
    %vm15 = vcmask 982912
    %16 = vst.msk [vmem:[#allocation0] sm:$0x1] %vm15, %v14
    %s17 = scalar_lea.vmem %s0, 13
    %v18 = vld [vmem:[%s17] sm:$0x1]
    %19 = vrot.lane.b32.xlu0 %v18, 104
    %v20 = vpop.permute.xlu0 %19
    %vm21 = vcmask 917312
    %22 = vst.msk [vmem:[#allocation0] sm:$0x1] %vm21, %v20
    %s23 = scalar_lea.vmem %s0, 12
    %v24 = vld [vmem:[%s23] sm:$0x1]
    %25 = vrot.lane.b32.xlu0 %v24, 96
    %v26 = vpop.permute.xlu0 %25
    %vm27 = vcmask 851712
    %28 = vst.msk [vmem:[#allocation0] sm:$0x1] %vm27, %v26
    %s29 = scalar_lea.vmem %s0, 11
    %v30 = vld [vmem:[%s29] sm:$0x1]
    %31 = vrot.lane.b32.xlu0 %v30, 88
    %v32 = vpop.permute.xlu0 %31
    %vm33 = vcmask 786112
    %34 = vst.msk [vmem:[#allocation0] sm:$0x1] %vm33, %v32
    %s35 = scalar_lea.vmem %s0, 10
    %v36 = vld [vmem:[%s35] sm:$0x1]
    %37 = vrot.lane.b32.xlu0 %v36, 80
    %v38 = vpop.permute.xlu0 %37
    %vm39 = vcmask 720512
    %40 = vst.msk [vmem:[#allocation0] sm:$0x1] %vm39, %v38
    %s41 = scalar_lea.vmem %s0, 9
    %v42 = vld [vmem:[%s41] sm:$0x1]
    %43 = vrot.lane.b32.xlu0 %v42, 72
    %v44 = vpop.permute.xlu0 %43
    %vm45 = vcmask 654912
    %46 = vst.msk [vmem:[#allocation0] sm:$0x1] %vm45, %v44
    %s47 = scalar_lea.vmem %s0, 8
    %v48 = vld [vmem:[%s47] sm:$0x1]
    %49 = vrot.lane.b32.xlu0 %v48, 64
    %v50 = vpop.permute.xlu0 %49
    %vm51 = vcmask 589312
    %52 = vst.msk [vmem:[#allocation0] sm:$0x1] %vm51, %v50
    %s53 = scalar_lea.vmem %s0, 7
    %v54 = vld [vmem:[%s53] sm:$0x1]
    %55 = vrot.lane.b32.xlu0 %v54, 56
    %v56 = vpop.permute.xlu0 %55
    %vm57 = vcmask 523712
    %58 = vst.msk [vmem:[#allocation0] sm:$0x1] %vm57, %v56
    %s59 = scalar_lea.vmem %s0, 6
    %v60 = vld [vmem:[%s59] sm:$0x1]
    %61 = vrot.lane.b32.xlu0 %v60, 48
    %v62 = vpop.permute.xlu0 %61
    %vm63 = vcmask 458112
    %64 = vst.msk [vmem:[#allocation0] sm:$0x1] %vm63, %v62
    %s65 = scalar_lea.vmem %s0, 5
    %v66 = vld [vmem:[%s65] sm:$0x1]
    %67 = vrot.lane.b32.xlu0 %v66, 40
    %v68 = vpop.permute.xlu0 %67
    %vm69 = vcmask 392512
    %70 = vst.msk [vmem:[#allocation0] sm:$0x1] %vm69, %v68
    %s71 = scalar_lea.vmem %s0, 4
    %v72 = vld [vmem:[%s71] sm:$0x1]
    %73 = vrot.lane.b32.xlu0 %v72, 32
    %v74 = vpop.permute.xlu0 %73
    %vm75 = vcmask 326912
    %76 = vst.msk [vmem:[#allocation0] sm:$0x1] %vm75, %v74
    %s77 = scalar_lea.vmem %s0, 3
    %v78 = vld [vmem:[%s77] sm:$0x1]
    %79 = vrot.lane.b32.xlu0 %v78, 24
    %v80 = vpop.permute.xlu0 %79
    %vm81 = vcmask 261312
    %82 = vst.msk [vmem:[#allocation0] sm:$0x1] %vm81, %v80
    %s83 = scalar_lea.vmem %s0, 2
    %v84 = vld [vmem:[%s83] sm:$0x1]
    %85 = vrot.lane.b32.xlu0 %v84, 16
    %v86 = vpop.permute.xlu0 %85
    %vm87 = vcmask 195712
    %88 = vst.msk [vmem:[#allocation0] sm:$0x1] %vm87, %v86
    %s89 = scalar_lea.vmem %s0, 1
    %v90 = vld [vmem:[%s89] sm:$0x1]
    %91 = vrot.lane.b32.xlu0 %v90, 8
    %v92 = vpop.permute.xlu0 %91
    %vm93 = vcmask 130112
    %94 = vst.msk [vmem:[#allocation0] sm:$0x1] %vm93, %v92
    %s96 = sshll.u32 1, 1
    %s97 = ssub.s32 %s96, 1
    %v99 = vld [vmem:[#allocation0] sm:%s97]
    %s100 = sshll.u32 1, 1
    %s101 = ssub.s32 %s100, 1
    %102 = vst [vmem:[%s1] sm:%s101] %v99

// kernel: tile.33
$region0: #{tile.33}
  #allocation0 [shape = 's32[1]{0}', space=sflag, size = 0x4, scoped, tag = 'scoped memory for tile.33']
  %s0 = inlined_call_operand.vmem [shape: f32[16], index: 0, kind: input, shape index: {}]
  %s1 = inlined_call_operand.vmem [shape: f32[16,16], index: 1, kind: output, shape index: {}]
  // Predicated region
  $region2: #{tile.33} parent=0 // pred_check
    _
  $region3: #{tile.33} parent=0 // pred_check_branch
    %3 = sbr.rel (0) target = $region5
  $region4: #{tile.33} parent=0 // pred_region
    _
  $region5: #{tile.33} parent=0 // pred_fallthru
    _
  %v4 = vld [vmem:[%s0] ss:$0 sm:$0xff]
  %5 = vst [vmem:[%s1] sm:$0xff] %v4
  %s6 = scalar_lea.vmem %s1, 8
  %7 = vst [vmem:[%s6] sm:$0xff] %v4

// kernel: tile.34
$region0: #{tile.34}
  %s0 = inlined_call_operand.vmem [shape: f32[16,16], index: 0, kind: input, shape index: {}]
  %s1 = inlined_call_operand.vmem [shape: f32[1,256], index: 1, kind: output, shape index: {}]
  $region1: #{tile.34} parent=0
    #allocation0 [shape = 'u8[8192]{0}', space=vmem, size = 0x2000, scoped, tag = 'scoped mem for output reshape']
    %s2 = smov 3
    %v3 = vld [vmem:[%s0] ss:$8 sm:%s2]
    %vm4 = vcmask 130048
    %5 = vst.msk [vmem:[#allocation0] ss:$8 sm:$0x3] %vm4, %v3
    %s6 = scalar_lea.vmem %s0, 7
    %s7 = smov 3
    %v8 = vld [vmem:[%s6] ss:$8 sm:%s7]
    %9 = vrot.lane.b32.xlu0 %v8, 112
    %v10 = vpop.permute.xlu0 %9
    %vm11 = vcmask 1048448
    %12 = vst.msk [vmem:[#allocation0] ss:$8 sm:$0x3] %vm11, %v10
    %s13 = scalar_lea.vmem %s0, 6
    %s14 = smov 3
    %v15 = vld [vmem:[%s13] ss:$8 sm:%s14]
    %16 = vrot.lane.b32.xlu0 %v15, 96
    %v17 = vpop.permute.xlu0 %16
    %vm18 = vcmask 917248
    %19 = vst.msk [vmem:[#allocation0] ss:$8 sm:$0x3] %vm18, %v17
    %s20 = scalar_lea.vmem %s0, 5
    %s21 = smov 3
    %v22 = vld [vmem:[%s20] ss:$8 sm:%s21]
    %23 = vrot.lane.b32.xlu0 %v22, 80
    %v24 = vpop.permute.xlu0 %23
    %vm25 = vcmask 786048
    %26 = vst.msk [vmem:[#allocation0] ss:$8 sm:$0x3] %vm25, %v24
    %s27 = scalar_lea.vmem %s0, 4
    %s28 = smov 3
    %v29 = vld [vmem:[%s27] ss:$8 sm:%s28]
    %30 = vrot.lane.b32.xlu0 %v29, 64
    %v31 = vpop.permute.xlu0 %30
    %vm32 = vcmask 654848
    %33 = vst.msk [vmem:[#allocation0] ss:$8 sm:$0x3] %vm32, %v31
    %s34 = scalar_lea.vmem %s0, 3
    %s35 = smov 3
    %v36 = vld [vmem:[%s34] ss:$8 sm:%s35]
    %37 = vrot.lane.b32.xlu0 %v36, 48
    %v38 = vpop.permute.xlu0 %37
    %vm39 = vcmask 523648
    %40 = vst.msk [vmem:[#allocation0] ss:$8 sm:$0x3] %vm39, %v38
    %s41 = scalar_lea.vmem %s0, 2
    %s42 = smov 3
    %v43 = vld [vmem:[%s41] ss:$8 sm:%s42]
    %44 = vrot.lane.b32.xlu0 %v43, 32
    %v45 = vpop.permute.xlu0 %44
    %vm46 = vcmask 392448
    %47 = vst.msk [vmem:[#allocation0] ss:$8 sm:$0x3] %vm46, %v45
    %s48 = scalar_lea.vmem %s0, 1
    %s49 = smov 3
    %v50 = vld [vmem:[%s48] ss:$8 sm:%s49]
    %51 = vrot.lane.b32.xlu0 %v50, 16
    %v52 = vpop.permute.xlu0 %51
    %vm53 = vcmask 261248
    %54 = vst.msk [vmem:[#allocation0] ss:$8 sm:$0x3] %vm53, %v52
    %s56 = sshll.u32 1, 1
    %s57 = ssub.s32 %s56, 1
    %v59 = vld [vmem:[#allocation0] sm:%s57]
    %s60 = sshll.u32 1, 1
    %s61 = ssub.s32 %s60, 1
    %62 = vst [vmem:[%s1] sm:%s61] %v59
    %s63 = scalar_lea.vmem [#allocation0], 8
    %v64 = vld [vmem:[%s63] sm:%s57]
    %s65 = sshll.u32 1, 1
    %s66 = ssub.s32 %s65, 1
    %s67 = scalar_lea.vmem %s1, 1
    %68 = vst [vmem:[%s67] sm:%s66] %v64

// kernel: tile.38
$region0: #{tile.38}
  #allocation0 [shape = 's32[1]{0}', space=sflag, size = 0x4, scoped, tag = 'scoped memory for tile.38']
  %s0 = inlined_call_operand.vmem [shape: f32[24], index: 0, kind: input, shape index: {}]
  %s1 = inlined_call_operand.vmem [shape: f32[16,24], index: 1, kind: output, shape index: {}]
  // Predicated region
  $region2: #{tile.38} parent=0 // pred_check
    _
  $region3: #{tile.38} parent=0 // pred_check_branch
    %3 = sbr.rel (0) target = $region5
  $region4: #{tile.38} parent=0 // pred_region
    _
  $region5: #{tile.38} parent=0 // pred_fallthru
    _
  %v4 = vld [vmem:[%s0] ss:$0 sm:$0xff]
  %5 = vst [vmem:[%s1] sm:$0xff] %v4
  %s6 = scalar_lea.vmem %s1, 8
  %7 = vst [vmem:[%s6] sm:$0xff] %v4

// kernel: tile.39
$region0: #{tile.39}
  %s0 = inlined_call_operand.vmem [shape: f32[16,24], index: 0, kind: input, shape index: {}]
  %s1 = inlined_call_operand.vmem [shape: f32[1,384], index: 1, kind: output, shape index: {}]
  $region1: #{tile.39} parent=0
    #allocation0 [shape = 'u8[12288]{0}', space=vmem, size = 0x3000, scoped, tag = 'scoped mem for output reshape']
    %v2 = vld [vmem:[%s0] sm:$0x1]
    %vm3 = vcmask 195584
    %4 = vst.msk [vmem:[#allocation0] sm:$0x1] %vm3, %v2
    %s5 = scalar_lea.vmem %s0, 5
    %v6 = vld [vmem:[%s5] sm:$0x1]
    %s7 = scalar_lea.vmem %s0, 5
    %v8 = vld [vmem:[%s7] sm:$0x1]
    %vm9 = vcmask 64512
    %v10 = vsel %vm9, %v8, %v6
    %11 = vrot.lane.b32.xlu0 %v10, 120
    %v12 = vpop.permute.xlu0 %11
    %vm13 = vcmask 130048
    %s14 = scalar_lea.vmem [#allocation0], 8
    %15 = vst.msk [vmem:[%s14] sm:$0x1] %vm13, %v12
    %vm16 = vcmask 1048512
    %17 = vst.msk [vmem:[#allocation0] sm:$0x1] %vm16, %v12
    %s18 = scalar_lea.vmem %s0, 10
    %v19 = vld [vmem:[%s18] sm:$0x1]
    %s20 = scalar_lea.vmem %s0, 10
    %v21 = vld [vmem:[%s20] sm:$0x1]
    %vm22 = vcmask 130048
    %v23 = vsel %vm22, %v21, %v19
    %24 = vrot.lane.b32.xlu0 %v23, 112
    %v25 = vpop.permute.xlu0 %24
    %vm26 = vcmask 64512
    %s27 = scalar_lea.vmem [#allocation0], 16
    %28 = vst.msk [vmem:[%s27] sm:$0x1] %vm26, %v25
    %vm29 = vcmask 1048448
    %s30 = scalar_lea.vmem [#allocation0], 8
    %31 = vst.msk [vmem:[%s30] sm:$0x1] %vm29, %v25
    %s32 = scalar_lea.vmem %s0, 15
    %v33 = vld [vmem:[%s32] sm:$0x1]
    %34 = vrot.lane.b32.xlu0 %v33, 104
    %v35 = vpop.permute.xlu0 %34
    %vm36 = vcmask 1048384
    %s37 = scalar_lea.vmem [#allocation0], 16
    %38 = vst.msk [vmem:[%s37] sm:$0x1] %vm36, %v35
    %s39 = scalar_lea.vmem %s0, 4
    %v40 = vld [vmem:[%s39] sm:$0x1]
    %41 = vrot.lane.b32.xlu0 %v40, 96
    %v42 = vpop.permute.xlu0 %41
    %vm43 = vcmask 982784
    %44 = vst.msk [vmem:[#allocation0] sm:$0x1] %vm43, %v42
    %s45 = scalar_lea.vmem %s0, 9
    %v46 = vld [vmem:[%s45] sm:$0x1]
    %47 = vrot.lane.b32.xlu0 %v46, 88
    %v48 = vpop.permute.xlu0 %47
    %vm49 = vcmask 917184
    %s50 = scalar_lea.vmem [#allocation0], 8
    %51 = vst.msk [vmem:[%s50] sm:$0x1] %vm49, %v48
    %s52 = scalar_lea.vmem %s0, 14
    %v53 = vld [vmem:[%s52] sm:$0x1]
    %54 = vrot.lane.b32.xlu0 %v53, 80
    %v55 = vpop.permute.xlu0 %54
    %vm56 = vcmask 851584
    %s57 = scalar_lea.vmem [#allocation0], 16
    %58 = vst.msk [vmem:[%s57] sm:$0x1] %vm56, %v55
    %s59 = scalar_lea.vmem %s0, 3
    %v60 = vld [vmem:[%s59] sm:$0x1]
    %61 = vrot.lane.b32.xlu0 %v60, 72
    %v62 = vpop.permute.xlu0 %61
    %vm63 = vcmask 785984
    %64 = vst.msk [vmem:[#allocation0] sm:$0x1] %vm63, %v62
    %s65 = scalar_lea.vmem %s0, 8
    %v66 = vld [vmem:[%s65] sm:$0x1]
    %67 = vrot.lane.b32.xlu0 %v66, 64
    %v68 = vpop.permute.xlu0 %67
    %vm69 = vcmask 720384
    %s70 = scalar_lea.vmem [#allocation0], 8
    %71 = vst.msk [vmem:[%s70] sm:$0x1] %vm69, %v68
    %s72 = scalar_lea.vmem %s0, 13
    %v73 = vld [vmem:[%s72] sm:$0x1]
    %74 = vrot.lane.b32.xlu0 %v73, 56
    %v75 = vpop.permute.xlu0 %74
    %vm76 = vcmask 654784
    %s77 = scalar_lea.vmem [#allocation0], 16
    %78 = vst.msk [vmem:[%s77] sm:$0x1] %vm76, %v75
    %s79 = scalar_lea.vmem %s0, 2
    %v80 = vld [vmem:[%s79] sm:$0x1]
    %81 = vrot.lane.b32.xlu0 %v80, 48
    %v82 = vpop.permute.xlu0 %81
    %vm83 = vcmask 589184
    %84 = vst.msk [vmem:[#allocation0] sm:$0x1] %vm83, %v82
    %s85 = scalar_lea.vmem %s0, 7
    %v86 = vld [vmem:[%s85] sm:$0x1]
    %87 = vrot.lane.b32.xlu0 %v86, 40
    %v88 = vpop.permute.xlu0 %87
    %vm89 = vcmask 523584
    %s90 = scalar_lea.vmem [#allocation0], 8
    %91 = vst.msk [vmem:[%s90] sm:$0x1] %vm89, %v88
    %s92 = scalar_lea.vmem %s0, 12
    %v93 = vld [vmem:[%s92] sm:$0x1]
    %94 = vrot.lane.b32.xlu0 %v93, 32
    %v95 = vpop.permute.xlu0 %94
    %vm96 = vcmask 457984
    %s97 = scalar_lea.vmem [#allocation0], 16
    %98 = vst.msk [vmem:[%s97] sm:$0x1] %vm96, %v95
    %s99 = scalar_lea.vmem %s0, 1
    %v100 = vld [vmem:[%s99] sm:$0x1]
    %101 = vrot.lane.b32.xlu0 %v100, 24
    %v102 = vpop.permute.xlu0 %101
    %vm103 = vcmask 392384
    %104 = vst.msk [vmem:[#allocation0] sm:$0x1] %vm103, %v102
    %s105 = scalar_lea.vmem %s0, 6
    %v106 = vld [vmem:[%s105] sm:$0x1]
    %107 = vrot.lane.b32.xlu0 %v106, 16
    %v108 = vpop.permute.xlu0 %107
    %vm109 = vcmask 326784
    %s110 = scalar_lea.vmem [#allocation0], 8
    %111 = vst.msk [vmem:[%s110] sm:$0x1] %vm109, %v108
    %s112 = scalar_lea.vmem %s0, 11
    %v113 = vld [vmem:[%s112] sm:$0x1]
    %114 = vrot.lane.b32.xlu0 %v113, 8
    %v115 = vpop.permute.xlu0 %114
    %vm116 = vcmask 261184
    %s117 = scalar_lea.vmem [#allocation0], 16
    %118 = vst.msk [vmem:[%s117] sm:$0x1] %vm116, %v115
    %s120 = sshll.u32 1, 1
    %s121 = ssub.s32 %s120, 1
    %v123 = vld [vmem:[#allocation0] sm:%s121]
    %s124 = sshll.u32 1, 1
    %s125 = ssub.s32 %s124, 1
    %126 = vst [vmem:[%s1] sm:%s125] %v123
    %s127 = scalar_lea.vmem [#allocation0], 8
    %v128 = vld [vmem:[%s127] sm:%s121]
    %s129 = sshll.u32 1, 1
    %s130 = ssub.s32 %s129, 1
    %s131 = scalar_lea.vmem %s1, 1
    %132 = vst [vmem:[%s131] sm:%s130] %v128
    %s133 = scalar_lea.vmem [#allocation0], 16
    %v134 = vld [vmem:[%s133] sm:%s121]
    %s135 = sshll.u32 1, 1
    %s136 = ssub.s32 %s135, 1
    %s137 = smul.addr 1, 2
    %s138 = scalar_lea.vmem %s1, %s137
    %139 = vst [vmem:[%s138] sm:%s136] %v134

// kernel: qnet_forward.1
$region0: #{qnet_forward.1}
  #allocation0 [shape = 'u32[]', space=smem, size = 0x4, offset = 0x4, fixed_abs, tag = 'smem constant byte address 0x4 - core index']
  #allocation1 [shape = 'u32[144,128]{1,0:T(1,128)}', space=vmem, size = 0x12000, scoped, tag = 'internal scratch']
  %s0 = inlined_call_operand.vmem [shape: f32[256,128], index: 0, kind: input, shape index: {}]
  %s1 = inlined_call_operand.vmem [shape: f32[128,128], index: 1, kind: input, shape index: {}]
  %s2 = inlined_call_operand.vmem [shape: f32[1,128], index: 2, kind: input, shape index: {}]
  %s3 = inlined_call_operand.vmem [shape: f32[128,256], index: 3, kind: input, shape index: {}]
  %s4 = inlined_call_operand.vmem [shape: f32[1,256], index: 4, kind: input, shape index: {}]
  %s5 = inlined_call_operand.vmem [shape: f32[256,384], index: 5, kind: input, shape index: {}]
  %s6 = inlined_call_operand.vmem [shape: f32[1,384], index: 6, kind: input, shape index: {}]
  %s7 = inlined_call_operand.vmem [shape: f32[384,256], index: 7, kind: input, shape index: {}]
  %s8 = inlined_call_operand.vmem [shape: f32[1,256], index: 8, kind: input, shape index: {}]
  %s9 = inlined_call_operand.vmem [shape: f32[256,16], index: 9, kind: input, shape index: {}]
  %s10 = inlined_call_operand.vmem [shape: f32[1,16], index: 10, kind: input, shape index: {}]
  %s11 = inlined_call_operand.vmem [shape: f32[256,16], index: 11, kind: output, shape index: {}]
  %s12 = sld [smem:[#allocation0]]
  $region77: #{qnet_forward.1} parent=0
    _
  %s14 = ssub.s32 1, %s12
  %s15 = scalar_select 0, %s14, %s12
  loop: start=0, step=1, limit=4
  $region2: #{qnet_forward.1} parent=0 // loop_pre_header
    _
  $region3: #{qnet_forward.1} parent=0 // loop_header
    %s17 = sphi 0, %s21
    %p18 = scmp.ge.s32.totalorder %s17, 4
    %s27 = sphi 0, %s29
    %s30 = sphi 0, %s27
    %s31 = sphi 0, %s30
    %s47 = sphi 0, %s31
    %s51 = sphi 0, %s51
    %s53 = sphi 0, %s51
    %s54 = sphi 0, %s53
    %s68 = sphi 0, %s54
    %s72 = sphi 0, %s72
    %s74 = sphi 0, %s72
    %s75 = sphi 0, %s74
    %s89 = sphi 0, %s75
    %s93 = sphi 0, %s93
    %s95 = sphi 0, %s93
    %s96 = sphi 0, %s95
    %s110 = sphi 0, %s96
    %s114 = sphi 0, %s114
    %s116 = sphi 0, %s114
    %s117 = sphi 0, %s116
    %s131 = sphi 0, %s117
    %s135 = sphi 0, %s135
    %s137 = sphi 0, %s135
    %s138 = sphi 0, %s137
    %s152 = sphi 0, %s138
    %s156 = sphi 0, %s156
    %s158 = sphi 0, %s156
    %s159 = sphi 0, %s158
    %s173 = sphi 0, %s159
    %s177 = sphi 0, %s177
    %s179 = sphi 0, %s177
    %s180 = sphi 0, %s179
    %s194 = sphi 0, %s180
    %s198 = sphi 0, %s198
    %s200 = sphi 0, %s198
    %s201 = sphi 0, %s200
    %s215 = sphi 0, %s201
    %s219 = sphi 0, %s219
    %s221 = sphi 0, %s219
    %s222 = sphi 0, %s221
    %s236 = sphi 0, %s222
    %s240 = sphi 0, %s240
    %s242 = sphi 0, %s240
    %s243 = sphi 0, %s242
    %s257 = sphi 0, %s243
    %s263 = sphi 0, %s265
    %s266 = sphi 0, %s263
    %s267 = sphi 0, %s266
    %s283 = sphi 0, %s267
  $region4: #{qnet_forward.1} parent=0 // loop_header_branch
    %20 = sbr.rel (%p18) target = $region8
  $region5: #{qnet_forward.1} parent=0 // loop_body
    %s22 = ssub.s32 %s17, 1
    %s23 = ssub.s32 %s17, 2
    %s24 = sadd.s32 %s17, 1
    %s25 = ssub.s32 %s17, %s24
    %p26 = scmp.eq.s32.totalorder %s25, 0
    %s28 = sadd.s32 %s27, 1
    %s29 = scalar_select %p26, %s27, %s28
    %p32 = pneg %p26
    %p33 = scmp.eq.s32.totalorder %s17, 1
    %p34 = por %p32, %p33
    %p35 = scmp.ne.s32.totalorder %s27, %s30
    %p36 = scmp.eq.s32.totalorder %s17, 0
    %p37 = por %p35, %p36
    %p38 = scmp.ne.s32.totalorder %s27, %s30
    %p39 = scmp.eq.s32.totalorder %s22, 1
    %p40 = por %p38, %p39
    %p41 = scmp.ne.s32.totalorder %s30, %s31
    %p42 = scmp.eq.s32.totalorder %s22, 0
    %p43 = por %p41, %p42
    %p44 = scmp.ne.s32.totalorder %s30, %s31
    %p45 = scmp.eq.s32.totalorder %s23, 1
    %p46 = por %p44, %p45
    %p48 = scmp.ne.s32.totalorder %s31, %s47
    %p49 = scmp.eq.s32.totalorder %s23, 0
    %p50 = por %p48, %p49
    %s52 = sadd.s32 %s51, 1
    %p55 = scmp.eq.s32.totalorder %s17, 1
    %p56 = scmp.ne.s32.totalorder %s51, %s53
    %p57 = scmp.eq.s32.totalorder %s17, 0
    %p58 = por %p56, %p57
    %p59 = scmp.ne.s32.totalorder %s51, %s53
    %p60 = scmp.eq.s32.totalorder %s22, 1
    %p61 = por %p59, %p60
    %p62 = scmp.ne.s32.totalorder %s53, %s54
    %p63 = scmp.eq.s32.totalorder %s22, 0
    %p64 = por %p62, %p63
    %p65 = scmp.ne.s32.totalorder %s53, %s54
    %p66 = scmp.eq.s32.totalorder %s23, 1
    %p67 = por %p65, %p66
    %p69 = scmp.ne.s32.totalorder %s54, %s68
    %p70 = scmp.eq.s32.totalorder %s23, 0
    %p71 = por %p69, %p70
    %s73 = sadd.s32 %s72, 1
    %p76 = scmp.eq.s32.totalorder %s17, 1
    %p77 = scmp.ne.s32.totalorder %s72, %s74
    %p78 = scmp.eq.s32.totalorder %s17, 0
    %p79 = por %p77, %p78
    %p80 = scmp.ne.s32.totalorder %s72, %s74
    %p81 = scmp.eq.s32.totalorder %s22, 1
    %p82 = por %p80, %p81
    %p83 = scmp.ne.s32.totalorder %s74, %s75
    %p84 = scmp.eq.s32.totalorder %s22, 0
    %p85 = por %p83, %p84
    %p86 = scmp.ne.s32.totalorder %s74, %s75
    %p87 = scmp.eq.s32.totalorder %s23, 1
    %p88 = por %p86, %p87
    %p90 = scmp.ne.s32.totalorder %s75, %s89
    %p91 = scmp.eq.s32.totalorder %s23, 0
    %p92 = por %p90, %p91
    %s94 = sadd.s32 %s93, 1
    %p97 = scmp.eq.s32.totalorder %s17, 1
    %p98 = scmp.ne.s32.totalorder %s93, %s95
    %p99 = scmp.eq.s32.totalorder %s17, 0
    %p100 = por %p98, %p99
    %p101 = scmp.ne.s32.totalorder %s93, %s95
    %p102 = scmp.eq.s32.totalorder %s22, 1
    %p103 = por %p101, %p102
    %p104 = scmp.ne.s32.totalorder %s95, %s96
    %p105 = scmp.eq.s32.totalorder %s22, 0
    %p106 = por %p104, %p105
    %p107 = scmp.ne.s32.totalorder %s95, %s96
    %p108 = scmp.eq.s32.totalorder %s23, 1
    %p109 = por %p107, %p108
    %p111 = scmp.ne.s32.totalorder %s96, %s110
    %p112 = scmp.eq.s32.totalorder %s23, 0
    %p113 = por %p111, %p112
    %s115 = sadd.s32 %s114, 1
    %p118 = scmp.eq.s32.totalorder %s17, 1
    %p119 = scmp.ne.s32.totalorder %s114, %s116
    %p120 = scmp.eq.s32.totalorder %s17, 0
    %p121 = por %p119, %p120
    %p122 = scmp.ne.s32.totalorder %s114, %s116
    %p123 = scmp.eq.s32.totalorder %s22, 1
    %p124 = por %p122, %p123
    %p125 = scmp.ne.s32.totalorder %s116, %s117
    %p126 = scmp.eq.s32.totalorder %s22, 0
    %p127 = por %p125, %p126
    %p128 = scmp.ne.s32.totalorder %s116, %s117
    %p129 = scmp.eq.s32.totalorder %s23, 1
    %p130 = por %p128, %p129
    %p132 = scmp.ne.s32.totalorder %s117, %s131
    %p133 = scmp.eq.s32.totalorder %s23, 0
    %p134 = por %p132, %p133
    %s136 = sadd.s32 %s135, 1
    %p139 = scmp.eq.s32.totalorder %s17, 1
    %p140 = scmp.ne.s32.totalorder %s135, %s137
    %p141 = scmp.eq.s32.totalorder %s17, 0
    %p142 = por %p140, %p141
    %p143 = scmp.ne.s32.totalorder %s135, %s137
    %p144 = scmp.eq.s32.totalorder %s22, 1
    %p145 = por %p143, %p144
    %p146 = scmp.ne.s32.totalorder %s137, %s138
    %p147 = scmp.eq.s32.totalorder %s22, 0
    %p148 = por %p146, %p147
    %p149 = scmp.ne.s32.totalorder %s137, %s138
    %p150 = scmp.eq.s32.totalorder %s23, 1
    %p151 = por %p149, %p150
    %p153 = scmp.ne.s32.totalorder %s138, %s152
    %p154 = scmp.eq.s32.totalorder %s23, 0
    %p155 = por %p153, %p154
    %s157 = sadd.s32 %s156, 1
    %p160 = scmp.eq.s32.totalorder %s17, 1
    %p161 = scmp.ne.s32.totalorder %s156, %s158
    %p162 = scmp.eq.s32.totalorder %s17, 0
    %p163 = por %p161, %p162
    %p164 = scmp.ne.s32.totalorder %s156, %s158
    %p165 = scmp.eq.s32.totalorder %s22, 1
    %p166 = por %p164, %p165
    %p167 = scmp.ne.s32.totalorder %s158, %s159
    %p168 = scmp.eq.s32.totalorder %s22, 0
    %p169 = por %p167, %p168
    %p170 = scmp.ne.s32.totalorder %s158, %s159
    %p171 = scmp.eq.s32.totalorder %s23, 1
    %p172 = por %p170, %p171
    %p174 = scmp.ne.s32.totalorder %s159, %s173
    %p175 = scmp.eq.s32.totalorder %s23, 0
    %p176 = por %p174, %p175
    %s178 = sadd.s32 %s177, 1
    %p181 = scmp.eq.s32.totalorder %s17, 1
    %p182 = scmp.ne.s32.totalorder %s177, %s179
    %p183 = scmp.eq.s32.totalorder %s17, 0
    %p184 = por %p182, %p183
    %p185 = scmp.ne.s32.totalorder %s177, %s179
    %p186 = scmp.eq.s32.totalorder %s22, 1
    %p187 = por %p185, %p186
    %p188 = scmp.ne.s32.totalorder %s179, %s180
    %p189 = scmp.eq.s32.totalorder %s22, 0
    %p190 = por %p188, %p189
    %p191 = scmp.ne.s32.totalorder %s179, %s180
    %p192 = scmp.eq.s32.totalorder %s23, 1
    %p193 = por %p191, %p192
    %p195 = scmp.ne.s32.totalorder %s180, %s194
    %p196 = scmp.eq.s32.totalorder %s23, 0
    %p197 = por %p195, %p196
    %s199 = sadd.s32 %s198, 1
    %p202 = scmp.eq.s32.totalorder %s17, 1
    %p203 = scmp.ne.s32.totalorder %s198, %s200
    %p204 = scmp.eq.s32.totalorder %s17, 0
    %p205 = por %p203, %p204
    %p206 = scmp.ne.s32.totalorder %s198, %s200
    %p207 = scmp.eq.s32.totalorder %s22, 1
    %p208 = por %p206, %p207
    %p209 = scmp.ne.s32.totalorder %s200, %s201
    %p210 = scmp.eq.s32.totalorder %s22, 0
    %p211 = por %p209, %p210
    %p212 = scmp.ne.s32.totalorder %s200, %s201
    %p213 = scmp.eq.s32.totalorder %s23, 1
    %p214 = por %p212, %p213
    %p216 = scmp.ne.s32.totalorder %s201, %s215
    %p217 = scmp.eq.s32.totalorder %s23, 0
    %p218 = por %p216, %p217
    %s220 = sadd.s32 %s219, 1
    %p223 = scmp.eq.s32.totalorder %s17, 1
    %p224 = scmp.ne.s32.totalorder %s219, %s221
    %p225 = scmp.eq.s32.totalorder %s17, 0
    %p226 = por %p224, %p225
    %p227 = scmp.ne.s32.totalorder %s219, %s221
    %p228 = scmp.eq.s32.totalorder %s22, 1
    %p229 = por %p227, %p228
    %p230 = scmp.ne.s32.totalorder %s221, %s222
    %p231 = scmp.eq.s32.totalorder %s22, 0
    %p232 = por %p230, %p231
    %p233 = scmp.ne.s32.totalorder %s221, %s222
    %p234 = scmp.eq.s32.totalorder %s23, 1
    %p235 = por %p233, %p234
    %p237 = scmp.ne.s32.totalorder %s222, %s236
    %p238 = scmp.eq.s32.totalorder %s23, 0
    %p239 = por %p237, %p238
    %s241 = sadd.s32 %s240, 1
    %p244 = scmp.eq.s32.totalorder %s17, 1
    %p245 = scmp.ne.s32.totalorder %s240, %s242
    %p246 = scmp.eq.s32.totalorder %s17, 0
    %p247 = por %p245, %p246
    %p248 = scmp.ne.s32.totalorder %s240, %s242
    %p249 = scmp.eq.s32.totalorder %s22, 1
    %p250 = por %p248, %p249
    %p251 = scmp.ne.s32.totalorder %s242, %s243
    %p252 = scmp.eq.s32.totalorder %s22, 0
    %p253 = por %p251, %p252
    %p254 = scmp.ne.s32.totalorder %s242, %s243
    %p255 = scmp.eq.s32.totalorder %s23, 1
    %p256 = por %p254, %p255
    %p258 = scmp.ne.s32.totalorder %s243, %s257
    %p259 = scmp.eq.s32.totalorder %s23, 0
    %p260 = por %p258, %p259
    %s261 = ssub.s32 %s17, %s24
    %p262 = scmp.eq.s32.totalorder %s261, 0
    %s264 = sadd.s32 %s263, 1
    %s265 = scalar_select %p262, %s263, %s264
    %p268 = pneg %p262
    %p269 = scmp.eq.s32.totalorder %s17, 1
    %p270 = por %p268, %p269
    %p271 = scmp.ne.s32.totalorder %s263, %s266
    %p272 = scmp.eq.s32.totalorder %s17, 0
    %p273 = por %p271, %p272
    %p274 = scmp.ne.s32.totalorder %s263, %s266
    %p275 = scmp.eq.s32.totalorder %s22, 1
    %p276 = por %p274, %p275
    %p277 = scmp.ne.s32.totalorder %s266, %s267
    %p278 = scmp.eq.s32.totalorder %s22, 0
    %p279 = por %p277, %p278
    %p280 = scmp.ne.s32.totalorder %s266, %s267
    %p281 = scmp.eq.s32.totalorder %s23, 1
    %p282 = por %p280, %p281
    %p284 = scmp.ne.s32.totalorder %s267, %s283
    %p285 = scmp.eq.s32.totalorder %s23, 0
    %p286 = por %p284, %p285
    %p287 = scmp.le.s32.totalorder 1, %s17
    %p288 = scmp.lt.s32.totalorder %s17, 3
    %p289 = pnand %p287, %p288
    %p290 = pneg %p289
    // Predicated region
    $region9: #{qnet_forward.1} parent=5 // pred_check
      _
    $region10: #{qnet_forward.1} parent=5 // pred_check_branch
      %292 = sbr.rel (%p289) target = $region12
    $region11: #{qnet_forward.1} parent=5 // pred_region
      %s293 = ssub.s32 %s17, 1
      // Predicated region
      $region13: #{qnet_forward.1} parent=11 // pred_check
        %p294 = pneg %p64
      $region14: #{qnet_forward.1} parent=11 // pred_check_branch
        %296 = sbr.rel (%p294) target = $region16
      $region15: #{qnet_forward.1} parent=11 // pred_region
        _
      $region16: #{qnet_forward.1} parent=11 // pred_fallthru
        _
      // Predicated region
      $region17: #{qnet_forward.1} parent=11 // pred_check
        %p297 = pneg %p85
      $region18: #{qnet_forward.1} parent=11 // pred_check_branch
        %299 = sbr.rel (%p297) target = $region20
      $region19: #{qnet_forward.1} parent=11 // pred_region
        _
      $region20: #{qnet_forward.1} parent=11 // pred_fallthru
        _
      // Predicated region
      $region21: #{qnet_forward.1} parent=11 // pred_check
        %p300 = pneg %p106
      $region22: #{qnet_forward.1} parent=11 // pred_check_branch
        %302 = sbr.rel (%p300) target = $region24
      $region23: #{qnet_forward.1} parent=11 // pred_region
        _
      $region24: #{qnet_forward.1} parent=11 // pred_fallthru
        _
      // Predicated region
      $region25: #{qnet_forward.1} parent=11 // pred_check
        %p303 = pneg %p127
      $region26: #{qnet_forward.1} parent=11 // pred_check_branch
        %305 = sbr.rel (%p303) target = $region28
      $region27: #{qnet_forward.1} parent=11 // pred_region
        _
      $region28: #{qnet_forward.1} parent=11 // pred_fallthru
        _
      // Predicated region
      $region29: #{qnet_forward.1} parent=11 // pred_check
        %p306 = pneg %p148
      $region30: #{qnet_forward.1} parent=11 // pred_check_branch
        %308 = sbr.rel (%p306) target = $region32
      $region31: #{qnet_forward.1} parent=11 // pred_region
        _
      $region32: #{qnet_forward.1} parent=11 // pred_fallthru
        _
      // Predicated region
      $region33: #{qnet_forward.1} parent=11 // pred_check
        %p309 = pneg %p169
      $region34: #{qnet_forward.1} parent=11 // pred_check_branch
        %311 = sbr.rel (%p309) target = $region36
      $region35: #{qnet_forward.1} parent=11 // pred_region
        _
      $region36: #{qnet_forward.1} parent=11 // pred_fallthru
        _
      // Predicated region
      $region37: #{qnet_forward.1} parent=11 // pred_check
        %p312 = pneg %p190
      $region38: #{qnet_forward.1} parent=11 // pred_check_branch
        %314 = sbr.rel (%p312) target = $region40
      $region39: #{qnet_forward.1} parent=11 // pred_region
        _
      $region40: #{qnet_forward.1} parent=11 // pred_fallthru
        _
      // Predicated region
      $region41: #{qnet_forward.1} parent=11 // pred_check
        %p315 = pneg %p211
      $region42: #{qnet_forward.1} parent=11 // pred_check_branch
        %317 = sbr.rel (%p315) target = $region44
      $region43: #{qnet_forward.1} parent=11 // pred_region
        _
      $region44: #{qnet_forward.1} parent=11 // pred_fallthru
        _
      // Predicated region
      $region45: #{qnet_forward.1} parent=11 // pred_check
        %p318 = pneg %p232
      $region46: #{qnet_forward.1} parent=11 // pred_check_branch
        %320 = sbr.rel (%p318) target = $region48
      $region47: #{qnet_forward.1} parent=11 // pred_region
        _
      $region48: #{qnet_forward.1} parent=11 // pred_fallthru
        _
      // Predicated region
      $region49: #{qnet_forward.1} parent=11 // pred_check
        %p321 = pneg %p253
      $region50: #{qnet_forward.1} parent=11 // pred_check_branch
        %323 = sbr.rel (%p321) target = $region52
      $region51: #{qnet_forward.1} parent=11 // pred_region
        _
      $region52: #{qnet_forward.1} parent=11 // pred_fallthru
        _
    $region12: #{qnet_forward.1} parent=5 // pred_fallthru
      _
    %p324 = scmp.lt.s32.totalorder %s17, 2
    // Predicated region
    $region53: #{qnet_forward.1} parent=5 // pred_check
      %p325 = pneg %p324
    $region54: #{qnet_forward.1} parent=5 // pred_check_branch
      %327 = sbr.rel (%p325) target = $region56
    $region55: #{qnet_forward.1} parent=5 // pred_region
      // Predicated region
      $region57: #{qnet_forward.1} parent=55 // pred_check
        %p328 = pneg %p37
      $region58: #{qnet_forward.1} parent=55 // pred_check_branch
        %330 = sbr.rel (%p328) target = $region60
      $region59: #{qnet_forward.1} parent=55 // pred_region
        %s331 = smul.u32 16, %s17
        %p332 = scmp.lt.s32.totalorder %s331, 31
        %s333 = scalar_select %p332, %s331, 31
        %s334 = smul.addr %s333, 8
        %s335 = scalar_lea.vmem %s0, %s334
        %s336 = smul.u32 16, %s17
      $region60: #{qnet_forward.1} parent=55 // pred_fallthru
        _
    $region56: #{qnet_forward.1} parent=5 // pred_fallthru
      _
    %p337 = scmp.le.s32.totalorder 1, %s17
    %p338 = scmp.lt.s32.totalorder %s17, 3
    %p339 = pnand %p337, %p338
    %p340 = pneg %p339
    // Predicated region
    $region61: #{qnet_forward.1} parent=5 // pred_check
      _
    $region62: #{qnet_forward.1} parent=5 // pred_check_branch
      %342 = sbr.rel (%p339) target = $region64
    $region63: #{qnet_forward.1} parent=5 // pred_region
      %s343 = ssub.s32 %s17, 1
      %s344 = smul.u32 16, %s22
      %p345 = scmp.lt.s32.totalorder %s344, 31
      %s346 = scalar_select %p345, %s344, 31
      %s347 = smul.addr %s346, 8
      %s348 = scalar_lea.vmem %s0, %s347
      %p349 = pneg %p43
      %p350 = pneg %p40
      %p351 = pneg %p64
      %p352 = pneg %p61
      %p353 = pneg %p85
      %p354 = pneg %p82
      %p355 = pneg %p106
      %p356 = pneg %p103
      %p357 = pneg %p127
      %p358 = pneg %p124
      %p359 = pneg %p148
      %p360 = pneg %p145
      %p361 = pneg %p169
      %p362 = pneg %p166
      %p363 = pneg %p190
      %p364 = pneg %p187
      %p365 = pneg %p211
      %p366 = pneg %p208
      %p367 = pneg %p232
      %p368 = pneg %p229
      %p369 = pneg %p253
      %p370 = pneg %p250
      %p371 = pneg %p279
      %p372 = pneg %p276
      %s373 = smul.u32 16, %s22
      %p374 = scmp.lt.s32.totalorder %s373, 31
      %s375 = scalar_select %p374, %s373, 31
      %s376 = smul.addr %s375, 8
      %s377 = scalar_lea.vmem %s11, %s376
      %s378 = smul.u32 16, %s22
      %p379 = scmp.lt.s32.totalorder %s378, 31
      %s380 = scalar_select %p379, %s378, 31
      %s381 = smul.addr %s380, 8
      %s382 = scalar_lea.vmem %s0, %s381
      %s383 = smul.u32 16, %s22
      %s384 = smul.u32 16, %s22
      %p385 = scmp.lt.s32.totalorder %s384, 31
      %s386 = scalar_select %p385, %s384, 31
      %s387 = smul.addr %s386, 8
      %s388 = scalar_lea.vmem %s11, %s387
      %s389 = smul.u32 16, %s22
      %v390 = vld [vmem:[%s382] sm:$0xff]
      %v391 = vld [vmem:[%s382 + $0x8] sm:$0xff]
      %v392 = vld [vmem:[%s382 + $0x10] sm:$0xff]
      %v393 = vld [vmem:[%s382 + $0x18] sm:$0xff]
      %v394 = vld [vmem:[%s382 + $0x20] sm:$0xff]
      %v395 = vld [vmem:[%s382 + $0x28] sm:$0xff]
      %v396 = vld [vmem:[%s382 + $0x30] sm:$0xff]
      %v397 = vld [vmem:[%s382 + $0x38] sm:$0xff]
      %v398 = vld [vmem:[%s382 + $0x40] sm:$0xff]
      %v399 = vld [vmem:[%s382 + $0x48] sm:$0xff]
      %v400 = vld [vmem:[%s382 + $0x50] sm:$0xff]
      %v401 = vld [vmem:[%s382 + $0x58] sm:$0xff]
      %v402 = vld [vmem:[%s382 + $0x60] sm:$0xff]
      %v403 = vld [vmem:[%s382 + $0x68] sm:$0xff]
      %v404 = vld [vmem:[%s382 + $0x70] sm:$0xff]
      %v405 = vld [vmem:[%s382 + $0x78] sm:$0xff]
      %v406 = vld [vmem:[%s1] sm:$0xff]
      %v407 = vld [vmem:[%s1 + $0x8] sm:$0xff]
      %v408 = vld [vmem:[%s1 + $0x10] sm:$0xff]
      %v409 = vld [vmem:[%s1 + $0x18] sm:$0xff]
      %v410 = vld [vmem:[%s1 + $0x20] sm:$0xff]
      %v411 = vld [vmem:[%s1 + $0x28] sm:$0xff]
      %v412 = vld [vmem:[%s1 + $0x30] sm:$0xff]
      %v413 = vld [vmem:[%s1 + $0x38] sm:$0xff]
      %v414 = vld [vmem:[%s1 + $0x40] sm:$0xff]
      %v415 = vld [vmem:[%s1 + $0x48] sm:$0xff]
      %v416 = vld [vmem:[%s1 + $0x50] sm:$0xff]
      %v417 = vld [vmem:[%s1 + $0x58] sm:$0xff]
      %v418 = vld [vmem:[%s1 + $0x60] sm:$0xff]
      %v419 = vld [vmem:[%s1 + $0x68] sm:$0xff]
      %v420 = vld [vmem:[%s1 + $0x70] sm:$0xff]
      %v421 = vld [vmem:[%s1 + $0x78] sm:$0xff]
      %v422 = vld [vmem:[%s2] sm:$0x1]
      %v424 = vlaneseq
      %v425 = vshrl.u32 %v424, 7
      %v426 = vsub.s32 0, %v425
      %v427 = vrot.slane %v422, %v426
      %429 = vmatprep.subr.mxu0 0.0
      %430 = vmatpush1.msra.mxu0 %v421
      %431 = vmatprep.subr.mxu0 0.0
      %432 = vmatpush1.msra.mxu0 %v420
      %433 = vmatprep.subr.mxu0 0.0
      %434 = vmatpush1.msra.mxu0 %v419
      %435 = vmatprep.subr.mxu0 0.0
      %436 = vmatpush1.msra.mxu0 %v418
      %437 = vmatprep.subr.mxu0 0.0
      %438 = vmatpush1.msra.mxu0 %v417
      %439 = vmatprep.subr.mxu0 0.0
      %440 = vmatpush1.msra.mxu0 %v416
      %441 = vmatprep.subr.mxu0 0.0
      %442 = vmatpush1.msra.mxu0 %v415
      %443 = vmatprep.subr.mxu0 0.0
      %444 = vmatpush1.msra.mxu0 %v414
      %445 = vmatprep.subr.mxu0 0.0
      %446 = vmatpush1.msra.mxu0 %v413
      %447 = vmatprep.subr.mxu0 0.0
      %448 = vmatpush1.msra.mxu0 %v412
      %449 = vmatprep.subr.mxu0 0.0
      %450 = vmatpush1.msra.mxu0 %v411
      %451 = vmatprep.subr.mxu0 0.0
      %452 = vmatpush1.msra.mxu0 %v410
      %453 = vmatprep.subr.mxu0 0.0
      %454 = vmatpush1.msra.mxu0 %v409
      %455 = vmatprep.subr.mxu0 0.0
      %456 = vmatpush1.msra.mxu0 %v408
      %457 = vmatprep.subr.mxu0 0.0
      %458 = vmatpush1.msra.mxu0 %v407
      %459 = vmatprep.subr.mxu0 0.0
      %460 = vmatpush1.msra.mxu0 %v406
      %461 = vmatprep.subr.mxu0 0.0
      %462 = vmatpush2.msra.mxu0 0.0
      %463 = vmatprep.subr.mxu0 0.0
      %464 = vmatpush2.msra.mxu0 0.0
      %465 = vmatprep.subr.mxu0 0.0
      %466 = vmatpush2.msra.mxu0 0.0
      %467 = vmatprep.subr.mxu0 0.0
      %468 = vmatpush2.msra.mxu0 0.0
      %469 = vmatprep.subr.mxu0 0.0
      %470 = vmatpush2.msra.mxu0 0.0
      %471 = vmatprep.subr.mxu0 0.0
      %472 = vmatpush2.msra.mxu0 0.0
      %473 = vmatprep.subr.mxu0 0.0
      %474 = vmatpush2.msra.mxu0 0.0
      %475 = vmatprep.subr.mxu0 0.0
      %476 = vmatpush2.msra.mxu0 0.0
      %477 = vmatprep.subr.mxu0 0.0
      %478 = vmatpush2.msra.mxu0 0.0
      %479 = vmatprep.subr.mxu0 0.0
      %480 = vmatpush2.msra.mxu0 0.0
      %481 = vmatprep.subr.mxu0 0.0
      %482 = vmatpush2.msra.mxu0 0.0
      %483 = vmatprep.subr.mxu0 0.0
      %484 = vmatpush2.msra.mxu0 0.0
      %485 = vmatprep.subr.mxu0 0.0
      %486 = vmatpush2.msra.mxu0 0.0
      %487 = vmatprep.subr.mxu0 0.0
      %488 = vmatpush2.msra.mxu0 0.0
      %489 = vmatprep.subr.mxu0 0.0
      %490 = vmatpush2.msra.mxu0 0.0
      %491 = vmatprep.subr.mxu0 0.0
      %492 = vmatpush2.msra.mxu0 0.0
      %493 = vmatprep.mubr.f32.mxu0 0.0
      %494 = vmatmul.mubr.f32.gmra.mxu0 %v390
      %v495 = vpop.f32.mrf.mxu0
      %v496 = vadd.f32 %v427, %v495
      %v497 = vpop.f32.mrf.mxu0
      %498 = vmatprep.mubr.f32.mxu0 0.0
      %499 = vmatmul.mubr.f32.gmra.mxu0 %v391
      %v500 = vpop.f32.mrf.mxu0
      %v501 = vadd.f32 %v427, %v500
      %v502 = vpop.f32.mrf.mxu0
      %503 = vmatprep.mubr.f32.mxu0 0.0
      %504 = vmatmul.mubr.f32.gmra.mxu0 %v392
      %v505 = vpop.f32.mrf.mxu0
      %v506 = vadd.f32 %v427, %v505
      %v507 = vpop.f32.mrf.mxu0
      %508 = vmatprep.mubr.f32.mxu0 0.0
      %509 = vmatmul.mubr.f32.gmra.mxu0 %v393
      %v510 = vpop.f32.mrf.mxu0
      %v511 = vadd.f32 %v427, %v510
      %v512 = vpop.f32.mrf.mxu0
      %513 = vmatprep.mubr.f32.mxu0 0.0
      %514 = vmatmul.mubr.f32.gmra.mxu0 %v394
      %v515 = vpop.f32.mrf.mxu0
      %v516 = vadd.f32 %v427, %v515
      %v517 = vpop.f32.mrf.mxu0
      %518 = vmatprep.mubr.f32.mxu0 0.0
      %519 = vmatmul.mubr.f32.gmra.mxu0 %v395
      %v520 = vpop.f32.mrf.mxu0
      %v521 = vadd.f32 %v427, %v520
      %v522 = vpop.f32.mrf.mxu0
      %523 = vmatprep.mubr.f32.mxu0 0.0
      %524 = vmatmul.mubr.f32.gmra.mxu0 %v396
      %v525 = vpop.f32.mrf.mxu0
      %v526 = vadd.f32 %v427, %v525
      %v527 = vpop.f32.mrf.mxu0
      %528 = vmatprep.mubr.f32.mxu0 0.0
      %529 = vmatmul.mubr.f32.gmra.mxu0 %v397
      %v530 = vpop.f32.mrf.mxu0
      %v531 = vadd.f32 %v427, %v530
      %v532 = vpop.f32.mrf.mxu0
      %533 = vmatprep.mubr.f32.mxu0 0.0
      %534 = vmatmul.mubr.f32.gmra.mxu0 %v398
      %v535 = vpop.f32.mrf.mxu0
      %v536 = vadd.f32 %v427, %v535
      %v537 = vpop.f32.mrf.mxu0
      %538 = vmatprep.mubr.f32.mxu0 0.0
      %539 = vmatmul.mubr.f32.gmra.mxu0 %v399
      %v540 = vpop.f32.mrf.mxu0
      %v541 = vadd.f32 %v427, %v540
      %v542 = vpop.f32.mrf.mxu0
      %543 = vmatprep.mubr.f32.mxu0 0.0
      %544 = vmatmul.mubr.f32.gmra.mxu0 %v400
      %v545 = vpop.f32.mrf.mxu0
      %v546 = vadd.f32 %v427, %v545
      %v547 = vpop.f32.mrf.mxu0
      %548 = vmatprep.mubr.f32.mxu0 0.0
      %549 = vmatmul.mubr.f32.gmra.mxu0 %v401
      %v550 = vpop.f32.mrf.mxu0
      %v551 = vadd.f32 %v427, %v550
      %v552 = vpop.f32.mrf.mxu0
      %553 = vmatprep.mubr.f32.mxu0 0.0
      %554 = vmatmul.mubr.f32.gmra.mxu0 %v402
      %v555 = vpop.f32.mrf.mxu0
      %v556 = vadd.f32 %v427, %v555
      %v557 = vpop.f32.mrf.mxu0
      %558 = vmatprep.mubr.f32.mxu0 0.0
      %559 = vmatmul.mubr.f32.gmra.mxu0 %v403
      %v560 = vpop.f32.mrf.mxu0
      %v561 = vadd.f32 %v427, %v560
      %v562 = vpop.f32.mrf.mxu0
      %563 = vmatprep.mubr.f32.mxu0 0.0
      %564 = vmatmul.mubr.f32.gmra.mxu0 %v404
      %v565 = vpop.f32.mrf.mxu0
      %v566 = vadd.f32 %v427, %v565
      %v567 = vpop.f32.mrf.mxu0
      %568 = vmatprep.mubr.f32.mxu0 0.0
      %569 = vmatmul.mubr.f32.gmra.mxu0 %v405
      %v570 = vpop.f32.mrf.mxu0
      %v571 = vadd.f32 %v427, %v570
      %v572 = vpop.f32.mrf.mxu0
      %573 = vdwg.mxu0
      %v574 = vtanh.pop %v496
      %v575 = vtanh.pop %v501
      %v576 = vtanh.pop %v506
      %v577 = vtanh.pop %v511
      %v578 = vtanh.pop %v516
      %v579 = vtanh.pop %v521
      %v580 = vtanh.pop %v526
      %v581 = vtanh.pop %v531
      %v582 = vtanh.pop %v536
      %v583 = vtanh.pop %v541
      %v584 = vtanh.pop %v546
      %v585 = vtanh.pop %v551
      %v586 = vtanh.pop %v556
      %v587 = vtanh.pop %v561
      %v588 = vtanh.pop %v566
      %v589 = vtanh.pop %v571
      %v590 = vld [vmem:[%s3] sm:$0xff]
      %v591 = vld [vmem:[%s3 + $0x8] sm:$0xff]
      %v592 = vld [vmem:[%s3 + $0x10] sm:$0xff]
      %v593 = vld [vmem:[%s3 + $0x18] sm:$0xff]
      %v594 = vld [vmem:[%s3 + $0x20] sm:$0xff]
      %v595 = vld [vmem:[%s3 + $0x28] sm:$0xff]
      %v596 = vld [vmem:[%s3 + $0x30] sm:$0xff]
      %v597 = vld [vmem:[%s3 + $0x38] sm:$0xff]
      %v598 = vld [vmem:[%s3 + $0x40] sm:$0xff]
      %v599 = vld [vmem:[%s3 + $0x48] sm:$0xff]
      %v600 = vld [vmem:[%s3 + $0x50] sm:$0xff]
      %v601 = vld [vmem:[%s3 + $0x58] sm:$0xff]
      %v602 = vld [vmem:[%s3 + $0x60] sm:$0xff]
      %v603 = vld [vmem:[%s3 + $0x68] sm:$0xff]
      %v604 = vld [vmem:[%s3 + $0x70] sm:$0xff]
      %v605 = vld [vmem:[%s3 + $0x78] sm:$0xff]
      %v606 = vld [vmem:[%s3 + $0x80] sm:$0xff]
      %v607 = vld [vmem:[%s3 + $0x88] sm:$0xff]
      %v608 = vld [vmem:[%s3 + $0x90] sm:$0xff]
      %v609 = vld [vmem:[%s3 + $0x98] sm:$0xff]
      %v610 = vld [vmem:[%s3 + $0xa0] sm:$0xff]
      %v611 = vld [vmem:[%s3 + $0xa8] sm:$0xff]
      %v612 = vld [vmem:[%s3 + $0xb0] sm:$0xff]
      %v613 = vld [vmem:[%s3 + $0xb8] sm:$0xff]
      %v614 = vld [vmem:[%s3 + $0xc0] sm:$0xff]
      %v615 = vld [vmem:[%s3 + $0xc8] sm:$0xff]
      %v616 = vld [vmem:[%s3 + $0xd0] sm:$0xff]
      %v617 = vld [vmem:[%s3 + $0xd8] sm:$0xff]
      %v618 = vld [vmem:[%s3 + $0xe0] sm:$0xff]
      %v619 = vld [vmem:[%s3 + $0xe8] sm:$0xff]
      %v620 = vld [vmem:[%s3 + $0xf0] sm:$0xff]
      %v621 = vld [vmem:[%s3 + $0xf8] sm:$0xff]
      %v622 = vld [vmem:[%s4] sm:$0x3]
      %v624 = vlaneseq
      %v625 = vshrl.u32 %v624, 7
      %v626 = vsub.s32 0, %v625
      %v627 = vrot.slane %v622, %v626
      %v628 = vlaneseq
      %v629 = vshrl.u32 %v628, 7
      %v630 = vsub.s32 1, %v629
      %v631 = vrot.slane %v622, %v630
      %634 = vmatprep.subr.mxu0 %v621
      %635 = vmatpush1.msra.mxu0 %v620
      %636 = vmatprep.subr.mxu0 %v619
      %637 = vmatpush1.msra.mxu0 %v618
      %638 = vmatprep.subr.mxu0 %v617
      %639 = vmatpush1.msra.mxu0 %v616
      %640 = vmatprep.subr.mxu0 %v615
      %641 = vmatpush1.msra.mxu0 %v614
      %642 = vmatprep.subr.mxu0 %v613
      %643 = vmatpush1.msra.mxu0 %v612
      %644 = vmatprep.subr.mxu0 %v611
      %645 = vmatpush1.msra.mxu0 %v610
      %646 = vmatprep.subr.mxu0 %v609
      %647 = vmatpush1.msra.mxu0 %v608
      %648 = vmatprep.subr.mxu0 %v607
      %649 = vmatpush1.msra.mxu0 %v606
      %650 = vmatprep.subr.mxu0 %v605
      %651 = vmatpush1.msra.mxu0 %v604
      %652 = vmatprep.subr.mxu0 %v603
      %653 = vmatpush1.msra.mxu0 %v602
      %654 = vmatprep.subr.mxu0 %v601
      %655 = vmatpush1.msra.mxu0 %v600
      %656 = vmatprep.subr.mxu0 %v599
      %657 = vmatpush1.msra.mxu0 %v598
      %658 = vmatprep.subr.mxu0 %v597
      %659 = vmatpush1.msra.mxu0 %v596
      %660 = vmatprep.subr.mxu0 %v595
      %661 = vmatpush1.msra.mxu0 %v594
      %662 = vmatprep.subr.mxu0 %v593
      %663 = vmatpush1.msra.mxu0 %v592
      %664 = vmatprep.subr.mxu0 %v591
      %665 = vmatpush1.msra.mxu0 %v590
      %666 = vmatprep.subr.mxu0 0.0
      %667 = vmatpush2.msra.mxu0 0.0
      %668 = vmatprep.subr.mxu0 0.0
      %669 = vmatpush2.msra.mxu0 0.0
      %670 = vmatprep.subr.mxu0 0.0
      %671 = vmatpush2.msra.mxu0 0.0
      %672 = vmatprep.subr.mxu0 0.0
      %673 = vmatpush2.msra.mxu0 0.0
      %674 = vmatprep.subr.mxu0 0.0
      %675 = vmatpush2.msra.mxu0 0.0
      %676 = vmatprep.subr.mxu0 0.0
      %677 = vmatpush2.msra.mxu0 0.0
      %678 = vmatprep.subr.mxu0 0.0
      %679 = vmatpush2.msra.mxu0 0.0
      %680 = vmatprep.subr.mxu0 0.0
      %681 = vmatpush2.msra.mxu0 0.0
      %682 = vmatprep.subr.mxu0 0.0
      %683 = vmatpush2.msra.mxu0 0.0
      %684 = vmatprep.subr.mxu0 0.0
      %685 = vmatpush2.msra.mxu0 0.0
      %686 = vmatprep.subr.mxu0 0.0
      %687 = vmatpush2.msra.mxu0 0.0
      %688 = vmatprep.subr.mxu0 0.0
      %689 = vmatpush2.msra.mxu0 0.0
      %690 = vmatprep.subr.mxu0 0.0
      %691 = vmatpush2.msra.mxu0 0.0
      %692 = vmatprep.subr.mxu0 0.0
      %693 = vmatpush2.msra.mxu0 0.0
      %694 = vmatprep.subr.mxu0 0.0
      %695 = vmatpush2.msra.mxu0 0.0
      %696 = vmatprep.subr.mxu0 0.0
      %697 = vmatpush2.msra.mxu0 0.0
      %698 = vmatprep.mubr.f32.mxu0 0.0
      %699 = vmatmul.mubr.f32.gmra.mxu0 %v574
      %v700 = vpop.f32.mrf.mxu0
      %v701 = vadd.f32 %v627, %v700
      %v702 = vpop.f32.mrf.mxu0
      %v703 = vadd.f32 %v631, %v702
      %704 = vmatprep.mubr.f32.mxu0 0.0
      %705 = vmatmul.mubr.f32.gmra.mxu0 %v575
      %v706 = vpop.f32.mrf.mxu0
      %v707 = vadd.f32 %v627, %v706
      %v708 = vpop.f32.mrf.mxu0
      %v709 = vadd.f32 %v631, %v708
      %710 = vmatprep.mubr.f32.mxu0 0.0
      %711 = vmatmul.mubr.f32.gmra.mxu0 %v576
      %v712 = vpop.f32.mrf.mxu0
      %v713 = vadd.f32 %v627, %v712
      %v714 = vpop.f32.mrf.mxu0
      %v715 = vadd.f32 %v631, %v714
      %716 = vmatprep.mubr.f32.mxu0 0.0
      %717 = vmatmul.mubr.f32.gmra.mxu0 %v577
      %v718 = vpop.f32.mrf.mxu0
      %v719 = vadd.f32 %v627, %v718
      %v720 = vpop.f32.mrf.mxu0
      %v721 = vadd.f32 %v631, %v720
      %722 = vmatprep.mubr.f32.mxu0 0.0
      %723 = vmatmul.mubr.f32.gmra.mxu0 %v578
      %v724 = vpop.f32.mrf.mxu0
      %v725 = vadd.f32 %v627, %v724
      %v726 = vpop.f32.mrf.mxu0
      %v727 = vadd.f32 %v631, %v726
      %728 = vmatprep.mubr.f32.mxu0 0.0
      %729 = vmatmul.mubr.f32.gmra.mxu0 %v579
      %v730 = vpop.f32.mrf.mxu0
      %v731 = vadd.f32 %v627, %v730
      %v732 = vpop.f32.mrf.mxu0
      %v733 = vadd.f32 %v631, %v732
      %734 = vmatprep.mubr.f32.mxu0 0.0
      %735 = vmatmul.mubr.f32.gmra.mxu0 %v580
      %v736 = vpop.f32.mrf.mxu0
      %v737 = vadd.f32 %v627, %v736
      %v738 = vpop.f32.mrf.mxu0
      %v739 = vadd.f32 %v631, %v738
      %740 = vmatprep.mubr.f32.mxu0 0.0
      %741 = vmatmul.mubr.f32.gmra.mxu0 %v581
      %v742 = vpop.f32.mrf.mxu0
      %v743 = vadd.f32 %v627, %v742
      %v744 = vpop.f32.mrf.mxu0
      %v745 = vadd.f32 %v631, %v744
      %746 = vmatprep.mubr.f32.mxu0 0.0
      %747 = vmatmul.mubr.f32.gmra.mxu0 %v582
      %v748 = vpop.f32.mrf.mxu0
      %v749 = vadd.f32 %v627, %v748
      %v750 = vpop.f32.mrf.mxu0
      %v751 = vadd.f32 %v631, %v750
      %752 = vmatprep.mubr.f32.mxu0 0.0
      %753 = vmatmul.mubr.f32.gmra.mxu0 %v583
      %v754 = vpop.f32.mrf.mxu0
      %v755 = vadd.f32 %v627, %v754
      %v756 = vpop.f32.mrf.mxu0
      %v757 = vadd.f32 %v631, %v756
      %758 = vmatprep.mubr.f32.mxu0 0.0
      %759 = vmatmul.mubr.f32.gmra.mxu0 %v584
      %v760 = vpop.f32.mrf.mxu0
      %v761 = vadd.f32 %v627, %v760
      %v762 = vpop.f32.mrf.mxu0
      %v763 = vadd.f32 %v631, %v762
      %764 = vmatprep.mubr.f32.mxu0 0.0
      %765 = vmatmul.mubr.f32.gmra.mxu0 %v585
      %v766 = vpop.f32.mrf.mxu0
      %v767 = vadd.f32 %v627, %v766
      %v768 = vpop.f32.mrf.mxu0
      %v769 = vadd.f32 %v631, %v768
      %770 = vmatprep.mubr.f32.mxu0 0.0
      %771 = vmatmul.mubr.f32.gmra.mxu0 %v586
      %v772 = vpop.f32.mrf.mxu0
      %v773 = vadd.f32 %v627, %v772
      %v774 = vpop.f32.mrf.mxu0
      %v775 = vadd.f32 %v631, %v774
      %776 = vmatprep.mubr.f32.mxu0 0.0
      %777 = vmatmul.mubr.f32.gmra.mxu0 %v587
      %v778 = vpop.f32.mrf.mxu0
      %v779 = vadd.f32 %v627, %v778
      %v780 = vpop.f32.mrf.mxu0
      %v781 = vadd.f32 %v631, %v780
      %782 = vmatprep.mubr.f32.mxu0 0.0
      %783 = vmatmul.mubr.f32.gmra.mxu0 %v588
      %v784 = vpop.f32.mrf.mxu0
      %v785 = vadd.f32 %v627, %v784
      %v786 = vpop.f32.mrf.mxu0
      %v787 = vadd.f32 %v631, %v786
      %788 = vmatprep.mubr.f32.mxu0 0.0
      %789 = vmatmul.mubr.f32.gmra.mxu0 %v589
      %v790 = vpop.f32.mrf.mxu0
      %v791 = vadd.f32 %v627, %v790
      %v792 = vpop.f32.mrf.mxu0
      %v793 = vadd.f32 %v631, %v792
      %794 = vdwg.mxu0
      %v795 = vtanh.pop %v701
      %v796 = vtanh.pop %v703
      %v797 = vtanh.pop %v707
      %v798 = vtanh.pop %v709
      %v799 = vtanh.pop %v713
      %v800 = vtanh.pop %v715
      %v801 = vtanh.pop %v719
      %v802 = vtanh.pop %v721
      %v803 = vtanh.pop %v725
      %v804 = vtanh.pop %v727
      %v805 = vtanh.pop %v731
      %v806 = vtanh.pop %v733
      %v807 = vtanh.pop %v737
      %v808 = vtanh.pop %v739
      %v809 = vtanh.pop %v743
      %v810 = vtanh.pop %v745
      %v811 = vtanh.pop %v749
      %v812 = vtanh.pop %v751
      %v813 = vtanh.pop %v755
      %v814 = vtanh.pop %v757
      %v815 = vtanh.pop %v761
      %v816 = vtanh.pop %v763
      %v817 = vtanh.pop %v767
      %v818 = vtanh.pop %v769
      %v819 = vtanh.pop %v773
      %v820 = vtanh.pop %v775
      %v821 = vtanh.pop %v779
      %v822 = vtanh.pop %v781
      %v823 = vtanh.pop %v785
      %v824 = vtanh.pop %v787
      %v825 = vtanh.pop %v791
      %v826 = vtanh.pop %v793
      %v827 = vld [vmem:[%s5] sm:$0xff]
      %v828 = vld [vmem:[%s5 + $0x8] sm:$0xff]
      %v829 = vld [vmem:[%s5 + $0x10] sm:$0xff]
      %v830 = vld [vmem:[%s5 + $0x18] sm:$0xff]
      %v831 = vld [vmem:[%s5 + $0x20] sm:$0xff]
      %v832 = vld [vmem:[%s5 + $0x28] sm:$0xff]
      %v833 = vld [vmem:[%s5 + $0x30] sm:$0xff]
      %v834 = vld [vmem:[%s5 + $0x38] sm:$0xff]
      %v835 = vld [vmem:[%s5 + $0x40] sm:$0xff]
      %v836 = vld [vmem:[%s5 + $0x48] sm:$0xff]
      %v837 = vld [vmem:[%s5 + $0x50] sm:$0xff]
      %v838 = vld [vmem:[%s5 + $0x58] sm:$0xff]
      %v839 = vld [vmem:[%s5 + $0x60] sm:$0xff]
      %v840 = vld [vmem:[%s5 + $0x68] sm:$0xff]
      %v841 = vld [vmem:[%s5 + $0x70] sm:$0xff]
      %v842 = vld [vmem:[%s5 + $0x78] sm:$0xff]
      %v843 = vld [vmem:[%s5 + $0x80] sm:$0xff]
      %v844 = vld [vmem:[%s5 + $0x88] sm:$0xff]
      %v845 = vld [vmem:[%s5 + $0x90] sm:$0xff]
      %v846 = vld [vmem:[%s5 + $0x98] sm:$0xff]
      %v847 = vld [vmem:[%s5 + $0xa0] sm:$0xff]
      %v848 = vld [vmem:[%s5 + $0xa8] sm:$0xff]
      %v849 = vld [vmem:[%s5 + $0xb0] sm:$0xff]
      %v850 = vld [vmem:[%s5 + $0xb8] sm:$0xff]
      %v851 = vld [vmem:[%s5 + $0xc0] sm:$0xff]
      %v852 = vld [vmem:[%s5 + $0xc8] sm:$0xff]
      %v853 = vld [vmem:[%s5 + $0xd0] sm:$0xff]
      %v854 = vld [vmem:[%s5 + $0xd8] sm:$0xff]
      %v855 = vld [vmem:[%s5 + $0xe0] sm:$0xff]
      %v856 = vld [vmem:[%s5 + $0xe8] sm:$0xff]
      %v857 = vld [vmem:[%s5 + $0xf0] sm:$0xff]
      %v858 = vld [vmem:[%s5 + $0xf8] sm:$0xff]
      %v859 = vld [vmem:[%s5 + $0x100] sm:$0xff]
      %v860 = vld [vmem:[%s5 + $0x108] sm:$0xff]
      %v861 = vld [vmem:[%s5 + $0x110] sm:$0xff]
      %v862 = vld [vmem:[%s5 + $0x118] sm:$0xff]
      %v863 = vld [vmem:[%s5 + $0x120] sm:$0xff]
      %v864 = vld [vmem:[%s5 + $0x128] sm:$0xff]
      %v865 = vld [vmem:[%s5 + $0x130] sm:$0xff]
      %v866 = vld [vmem:[%s5 + $0x138] sm:$0xff]
      %v867 = vld [vmem:[%s5 + $0x140] sm:$0xff]
      %v868 = vld [vmem:[%s5 + $0x148] sm:$0xff]
      %v869 = vld [vmem:[%s5 + $0x150] sm:$0xff]
      %v870 = vld [vmem:[%s5 + $0x158] sm:$0xff]
      %v871 = vld [vmem:[%s5 + $0x160] sm:$0xff]
      %v872 = vld [vmem:[%s5 + $0x168] sm:$0xff]
      %v873 = vld [vmem:[%s5 + $0x170] sm:$0xff]
      %v874 = vld [vmem:[%s5 + $0x178] sm:$0xff]
      %v875 = vld [vmem:[%s5 + $0x180] sm:$0xff]
      %v876 = vld [vmem:[%s5 + $0x188] sm:$0xff]
      %v877 = vld [vmem:[%s5 + $0x190] sm:$0xff]
      %v878 = vld [vmem:[%s5 + $0x198] sm:$0xff]
      %v879 = vld [vmem:[%s5 + $0x1a0] sm:$0xff]
      %v880 = vld [vmem:[%s5 + $0x1a8] sm:$0xff]
      %v881 = vld [vmem:[%s5 + $0x1b0] sm:$0xff]
      %v882 = vld [vmem:[%s5 + $0x1b8] sm:$0xff]
      %v883 = vld [vmem:[%s5 + $0x1c0] sm:$0xff]
      %v884 = vld [vmem:[%s5 + $0x1c8] sm:$0xff]
      %v885 = vld [vmem:[%s5 + $0x1d0] sm:$0xff]
      %v886 = vld [vmem:[%s5 + $0x1d8] sm:$0xff]
      %v887 = vld [vmem:[%s5 + $0x1e0] sm:$0xff]
      %v888 = vld [vmem:[%s5 + $0x1e8] sm:$0xff]
      %v889 = vld [vmem:[%s5 + $0x1f0] sm:$0xff]
      %v890 = vld [vmem:[%s5 + $0x1f8] sm:$0xff]
      %v891 = vld [vmem:[%s5 + $0x200] sm:$0xff]
      %v892 = vld [vmem:[%s5 + $0x208] sm:$0xff]
      %v893 = vld [vmem:[%s5 + $0x210] sm:$0xff]
      %v894 = vld [vmem:[%s5 + $0x218] sm:$0xff]
      %v895 = vld [vmem:[%s5 + $0x220] sm:$0xff]
      %v896 = vld [vmem:[%s5 + $0x228] sm:$0xff]
      %v897 = vld [vmem:[%s5 + $0x230] sm:$0xff]
      %v898 = vld [vmem:[%s5 + $0x238] sm:$0xff]
      %v899 = vld [vmem:[%s5 + $0x240] sm:$0xff]
      %v900 = vld [vmem:[%s5 + $0x248] sm:$0xff]
      %v901 = vld [vmem:[%s5 + $0x250] sm:$0xff]
      %v902 = vld [vmem:[%s5 + $0x258] sm:$0xff]
      %v903 = vld [vmem:[%s5 + $0x260] sm:$0xff]
      %v904 = vld [vmem:[%s5 + $0x268] sm:$0xff]
      %v905 = vld [vmem:[%s5 + $0x270] sm:$0xff]
      %v906 = vld [vmem:[%s5 + $0x278] sm:$0xff]
      %v907 = vld [vmem:[%s5 + $0x280] sm:$0xff]
      %v908 = vld [vmem:[%s5 + $0x288] sm:$0xff]
      %v909 = vld [vmem:[%s5 + $0x290] sm:$0xff]
      %v910 = vld [vmem:[%s5 + $0x298] sm:$0xff]
      %v911 = vld [vmem:[%s5 + $0x2a0] sm:$0xff]
      %v912 = vld [vmem:[%s5 + $0x2a8] sm:$0xff]
      %v913 = vld [vmem:[%s5 + $0x2b0] sm:$0xff]
      %v914 = vld [vmem:[%s5 + $0x2b8] sm:$0xff]
      %v915 = vld [vmem:[%s5 + $0x2c0] sm:$0xff]
      %v916 = vld [vmem:[%s5 + $0x2c8] sm:$0xff]
      %v917 = vld [vmem:[%s5 + $0x2d0] sm:$0xff]
      %v918 = vld [vmem:[%s5 + $0x2d8] sm:$0xff]
      %v919 = vld [vmem:[%s5 + $0x2e0] sm:$0xff]
      %v920 = vld [vmem:[%s5 + $0x2e8] sm:$0xff]
      %v921 = vld [vmem:[%s5 + $0x2f0] sm:$0xff]
      %v922 = vld [vmem:[%s5 + $0x2f8] sm:$0xff]
      %v923 = vld [vmem:[%s6] sm:$0x7]
      %v925 = vlaneseq
      %v926 = vshrl.u32 %v925, 7
      %v927 = vsub.s32 0, %v926
      %v928 = vrot.slane %v923, %v927
      %v929 = vlaneseq
      %v930 = vshrl.u32 %v929, 7
      %v931 = vsub.s32 1, %v930
      %v932 = vrot.slane %v923, %v931
      %v933 = vlaneseq
      %v934 = vshrl.u32 %v933, 7
      %v935 = vsub.s32 2, %v934
      %v936 = vrot.slane %v923, %v935
      %940 = vmatprep.subr.mxu0 %v873
      %941 = vmatpush1.msra.mxu0 %v872
      %942 = vmatprep.subr.mxu0 %v870
      %943 = vmatpush1.msra.mxu0 %v869
      %944 = vmatprep.subr.mxu0 %v867
      %945 = vmatpush1.msra.mxu0 %v866
      %946 = vmatprep.subr.mxu0 %v864
      %947 = vmatpush1.msra.mxu0 %v863
      %948 = vmatprep.subr.mxu0 %v861
      %949 = vmatpush1.msra.mxu0 %v860
      %950 = vmatprep.subr.mxu0 %v858
      %951 = vmatpush1.msra.mxu0 %v857
      %952 = vmatprep.subr.mxu0 %v855
      %953 = vmatpush1.msra.mxu0 %v854
      %954 = vmatprep.subr.mxu0 %v852
      %955 = vmatpush1.msra.mxu0 %v851
      %956 = vmatprep.subr.mxu0 %v849
      %957 = vmatpush1.msra.mxu0 %v848
      %958 = vmatprep.subr.mxu0 %v846
      %959 = vmatpush1.msra.mxu0 %v845
      %960 = vmatprep.subr.mxu0 %v843
      %961 = vmatpush1.msra.mxu0 %v842
      %962 = vmatprep.subr.mxu0 %v840
      %963 = vmatpush1.msra.mxu0 %v839
      %964 = vmatprep.subr.mxu0 %v837
      %965 = vmatpush1.msra.mxu0 %v836
      %966 = vmatprep.subr.mxu0 %v834
      %967 = vmatpush1.msra.mxu0 %v833
      %968 = vmatprep.subr.mxu0 %v831
      %969 = vmatpush1.msra.mxu0 %v830
      %970 = vmatprep.subr.mxu0 %v828
      %971 = vmatpush1.msra.mxu0 %v827
      %972 = vmatprep.subr.mxu0 %v921
      %973 = vmatpush2.msra.mxu0 %v920
      %974 = vmatprep.subr.mxu0 %v918
      %975 = vmatpush2.msra.mxu0 %v917
      %976 = vmatprep.subr.mxu0 %v915
      %977 = vmatpush2.msra.mxu0 %v914
      %978 = vmatprep.subr.mxu0 %v912
      %979 = vmatpush2.msra.mxu0 %v911
      %980 = vmatprep.subr.mxu0 %v909
      %981 = vmatpush2.msra.mxu0 %v908
      %982 = vmatprep.subr.mxu0 %v906
      %983 = vmatpush2.msra.mxu0 %v905
      %984 = vmatprep.subr.mxu0 %v903
      %985 = vmatpush2.msra.mxu0 %v902
      %986 = vmatprep.subr.mxu0 %v900
      %987 = vmatpush2.msra.mxu0 %v899
      %988 = vmatprep.subr.mxu0 %v897
      %989 = vmatpush2.msra.mxu0 %v896
      %990 = vmatprep.subr.mxu0 %v894
      %991 = vmatpush2.msra.mxu0 %v893
      %992 = vmatprep.subr.mxu0 %v891
      %993 = vmatpush2.msra.mxu0 %v890
      %994 = vmatprep.subr.mxu0 %v888
      %995 = vmatpush2.msra.mxu0 %v887
      %996 = vmatprep.subr.mxu0 %v885
      %997 = vmatpush2.msra.mxu0 %v884
      %998 = vmatprep.subr.mxu0 %v882
      %999 = vmatpush2.msra.mxu0 %v881
      %1000 = vmatprep.subr.mxu0 %v879
      %1001 = vmatpush2.msra.mxu0 %v878
      %1002 = vmatprep.subr.mxu0 %v876
      %1003 = vmatpush2.msra.mxu0 %v875
      %1004 = vmatprep.mubr.f32.mxu0 %v796
      %1005 = vmatmul.mubr.f32.gmra.mxu0 %v795
      %v1006 = vpop.f32.mrf.mxu0
      %v1007 = vadd.f32 %v928, %v1006
      %v1008 = vpop.f32.mrf.mxu0
      %v1009 = vadd.f32 %v932, %v1008
      %1010 = vmatprep.mubr.f32.mxu0 %v798
      %1011 = vmatmul.mubr.f32.gmra.mxu0 %v797
      %v1012 = vpop.f32.mrf.mxu0
      %v1013 = vadd.f32 %v928, %v1012
      %v1014 = vpop.f32.mrf.mxu0
      %v1015 = vadd.f32 %v932, %v1014
      %1016 = vmatprep.mubr.f32.mxu0 %v800
      %1017 = vmatmul.mubr.f32.gmra.mxu0 %v799
      %v1018 = vpop.f32.mrf.mxu0
      %v1019 = vadd.f32 %v928, %v1018
      %v1020 = vpop.f32.mrf.mxu0
      %v1021 = vadd.f32 %v932, %v1020
      %1022 = vmatprep.mubr.f32.mxu0 %v802
      %1023 = vmatmul.mubr.f32.gmra.mxu0 %v801
      %v1024 = vpop.f32.mrf.mxu0
      %v1025 = vadd.f32 %v928, %v1024
      %v1026 = vpop.f32.mrf.mxu0
      %v1027 = vadd.f32 %v932, %v1026
      %1028 = vmatprep.mubr.f32.mxu0 %v804
      %1029 = vmatmul.mubr.f32.gmra.mxu0 %v803
      %v1030 = vpop.f32.mrf.mxu0
      %v1031 = vadd.f32 %v928, %v1030
      %v1032 = vpop.f32.mrf.mxu0
      %v1033 = vadd.f32 %v932, %v1032
      %1034 = vmatprep.mubr.f32.mxu0 %v806
      %1035 = vmatmul.mubr.f32.gmra.mxu0 %v805
      %v1036 = vpop.f32.mrf.mxu0
      %v1037 = vadd.f32 %v928, %v1036
      %v1038 = vpop.f32.mrf.mxu0
      %v1039 = vadd.f32 %v932, %v1038
      %1040 = vmatprep.mubr.f32.mxu0 %v808
      %1041 = vmatmul.mubr.f32.gmra.mxu0 %v807
      %v1042 = vpop.f32.mrf.mxu0
      %v1043 = vadd.f32 %v928, %v1042
      %v1044 = vpop.f32.mrf.mxu0
      %v1045 = vadd.f32 %v932, %v1044
      %1046 = vmatprep.mubr.f32.mxu0 %v810
      %1047 = vmatmul.mubr.f32.gmra.mxu0 %v809
      %v1048 = vpop.f32.mrf.mxu0
      %v1049 = vadd.f32 %v928, %v1048
      %v1050 = vpop.f32.mrf.mxu0
      %v1051 = vadd.f32 %v932, %v1050
      %1052 = vmatprep.mubr.f32.mxu0 %v812
      %1053 = vmatmul.mubr.f32.gmra.mxu0 %v811
      %v1054 = vpop.f32.mrf.mxu0
      %v1055 = vadd.f32 %v928, %v1054
      %v1056 = vpop.f32.mrf.mxu0
      %v1057 = vadd.f32 %v932, %v1056
      %1058 = vmatprep.mubr.f32.mxu0 %v814
      %1059 = vmatmul.mubr.f32.gmra.mxu0 %v813
      %v1060 = vpop.f32.mrf.mxu0
      %v1061 = vadd.f32 %v928, %v1060
      %v1062 = vpop.f32.mrf.mxu0
      %v1063 = vadd.f32 %v932, %v1062
      %1064 = vmatprep.mubr.f32.mxu0 %v816
      %1065 = vmatmul.mubr.f32.gmra.mxu0 %v815
      %v1066 = vpop.f32.mrf.mxu0
      %v1067 = vadd.f32 %v928, %v1066
      %v1068 = vpop.f32.mrf.mxu0
      %v1069 = vadd.f32 %v932, %v1068
      %1070 = vmatprep.mubr.f32.mxu0 %v818
      %1071 = vmatmul.mubr.f32.gmra.mxu0 %v817
      %v1072 = vpop.f32.mrf.mxu0
      %v1073 = vadd.f32 %v928, %v1072
      %v1074 = vpop.f32.mrf.mxu0
      %v1075 = vadd.f32 %v932, %v1074
      %1076 = vmatprep.mubr.f32.mxu0 %v820
      %1077 = vmatmul.mubr.f32.gmra.mxu0 %v819
      %v1078 = vpop.f32.mrf.mxu0
      %v1079 = vadd.f32 %v928, %v1078
      %v1080 = vpop.f32.mrf.mxu0
      %v1081 = vadd.f32 %v932, %v1080
      %1082 = vmatprep.mubr.f32.mxu0 %v822
      %1083 = vmatmul.mubr.f32.gmra.mxu0 %v821
      %v1084 = vpop.f32.mrf.mxu0
      %v1085 = vadd.f32 %v928, %v1084
      %v1086 = vpop.f32.mrf.mxu0
      %v1087 = vadd.f32 %v932, %v1086
      %1088 = vmatprep.mubr.f32.mxu0 %v824
      %1089 = vmatmul.mubr.f32.gmra.mxu0 %v823
      %v1090 = vpop.f32.mrf.mxu0
      %v1091 = vadd.f32 %v928, %v1090
      %v1092 = vpop.f32.mrf.mxu0
      %v1093 = vadd.f32 %v932, %v1092
      %1094 = vmatprep.mubr.f32.mxu0 %v826
      %1095 = vmatmul.mubr.f32.gmra.mxu0 %v825
      %v1096 = vpop.f32.mrf.mxu0
      %v1097 = vadd.f32 %v928, %v1096
      %v1098 = vpop.f32.mrf.mxu0
      %v1099 = vadd.f32 %v932, %v1098
      %1100 = vdwg.mxu0
      %1101 = vmatprep.subr.mxu0 0.0
      %1102 = vmatpush1.msra.mxu0 %v874
      %1103 = vmatprep.subr.mxu0 0.0
      %1104 = vmatpush1.msra.mxu0 %v871
      %1105 = vmatprep.subr.mxu0 0.0
      %1106 = vmatpush1.msra.mxu0 %v868
      %1107 = vmatprep.subr.mxu0 0.0
      %1108 = vmatpush1.msra.mxu0 %v865
      %1109 = vmatprep.subr.mxu0 0.0
      %1110 = vmatpush1.msra.mxu0 %v862
      %1111 = vmatprep.subr.mxu0 0.0
      %1112 = vmatpush1.msra.mxu0 %v859
      %1113 = vmatprep.subr.mxu0 0.0
      %1114 = vmatpush1.msra.mxu0 %v856
      %1115 = vmatprep.subr.mxu0 0.0
      %1116 = vmatpush1.msra.mxu0 %v853
      %1117 = vmatprep.subr.mxu0 0.0
      %1118 = vmatpush1.msra.mxu0 %v850
      %1119 = vmatprep.subr.mxu0 0.0
      %1120 = vmatpush1.msra.mxu0 %v847
      %1121 = vmatprep.subr.mxu0 0.0
      %1122 = vmatpush1.msra.mxu0 %v844
      %1123 = vmatprep.subr.mxu0 0.0
      %1124 = vmatpush1.msra.mxu0 %v841
      %1125 = vmatprep.subr.mxu0 0.0
      %1126 = vmatpush1.msra.mxu0 %v838
      %1127 = vmatprep.subr.mxu0 0.0
      %1128 = vmatpush1.msra.mxu0 %v835
      %1129 = vmatprep.subr.mxu0 0.0
      %1130 = vmatpush1.msra.mxu0 %v832
      %1131 = vmatprep.subr.mxu0 0.0
      %1132 = vmatpush1.msra.mxu0 %v829
      %1133 = vmatprep.subr.mxu0 0.0
      %1134 = vmatpush2.msra.mxu0 %v922
      %1135 = vmatprep.subr.mxu0 0.0
      %1136 = vmatpush2.msra.mxu0 %v919
      %1137 = vmatprep.subr.mxu0 0.0
      %1138 = vmatpush2.msra.mxu0 %v916
      %1139 = vmatprep.subr.mxu0 0.0
      %1140 = vmatpush2.msra.mxu0 %v913
      %1141 = vmatprep.subr.mxu0 0.0
      %1142 = vmatpush2.msra.mxu0 %v910
      %1143 = vmatprep.subr.mxu0 0.0
      %1144 = vmatpush2.msra.mxu0 %v907
      %1145 = vmatprep.subr.mxu0 0.0
      %1146 = vmatpush2.msra.mxu0 %v904
      %1147 = vmatprep.subr.mxu0 0.0
      %1148 = vmatpush2.msra.mxu0 %v901
      %1149 = vmatprep.subr.mxu0 0.0
      %1150 = vmatpush2.msra.mxu0 %v898
      %1151 = vmatprep.subr.mxu0 0.0
      %1152 = vmatpush2.msra.mxu0 %v895
      %1153 = vmatprep.subr.mxu0 0.0
      %1154 = vmatpush2.msra.mxu0 %v892
      %1155 = vmatprep.subr.mxu0 0.0
      %1156 = vmatpush2.msra.mxu0 %v889
      %1157 = vmatprep.subr.mxu0 0.0
      %1158 = vmatpush2.msra.mxu0 %v886
      %1159 = vmatprep.subr.mxu0 0.0
      %1160 = vmatpush2.msra.mxu0 %v883
      %1161 = vmatprep.subr.mxu0 0.0
      %1162 = vmatpush2.msra.mxu0 %v880
      %1163 = vmatprep.subr.mxu0 0.0
      %1164 = vmatpush2.msra.mxu0 %v877
      %1165 = vmatprep.mubr.f32.mxu0 %v796
      %1166 = vmatmul.mubr.f32.gmra.mxu0 %v795
      %v1167 = vpop.f32.mrf.mxu0
      %v1168 = vadd.f32 %v936, %v1167
      %v1169 = vpop.f32.mrf.mxu0
      %1170 = vmatprep.mubr.f32.mxu0 %v798
      %1171 = vmatmul.mubr.f32.gmra.mxu0 %v797
      %v1172 = vpop.f32.mrf.mxu0
      %v1173 = vadd.f32 %v936, %v1172
      %v1174 = vpop.f32.mrf.mxu0
      %1175 = vmatprep.mubr.f32.mxu0 %v800
      %1176 = vmatmul.mubr.f32.gmra.mxu0 %v799
      %v1177 = vpop.f32.mrf.mxu0
      %v1178 = vadd.f32 %v936, %v1177
      %v1179 = vpop.f32.mrf.mxu0
      %1180 = vmatprep.mubr.f32.mxu0 %v802
      %1181 = vmatmul.mubr.f32.gmra.mxu0 %v801
      %v1182 = vpop.f32.mrf.mxu0
      %v1183 = vadd.f32 %v936, %v1182
      %v1184 = vpop.f32.mrf.mxu0
      %1185 = vmatprep.mubr.f32.mxu0 %v804
      %1186 = vmatmul.mubr.f32.gmra.mxu0 %v803
      %v1187 = vpop.f32.mrf.mxu0
      %v1188 = vadd.f32 %v936, %v1187
      %v1189 = vpop.f32.mrf.mxu0
      %1190 = vmatprep.mubr.f32.mxu0 %v806
      %1191 = vmatmul.mubr.f32.gmra.mxu0 %v805
      %v1192 = vpop.f32.mrf.mxu0
      %v1193 = vadd.f32 %v936, %v1192
      %v1194 = vpop.f32.mrf.mxu0
      %1195 = vmatprep.mubr.f32.mxu0 %v808
      %1196 = vmatmul.mubr.f32.gmra.mxu0 %v807
      %v1197 = vpop.f32.mrf.mxu0
      %v1198 = vadd.f32 %v936, %v1197
      %v1199 = vpop.f32.mrf.mxu0
      %1200 = vmatprep.mubr.f32.mxu0 %v810
      %1201 = vmatmul.mubr.f32.gmra.mxu0 %v809
      %v1202 = vpop.f32.mrf.mxu0
      %v1203 = vadd.f32 %v936, %v1202
      %v1204 = vpop.f32.mrf.mxu0
      %1205 = vmatprep.mubr.f32.mxu0 %v812
      %1206 = vmatmul.mubr.f32.gmra.mxu0 %v811
      %v1207 = vpop.f32.mrf.mxu0
      %v1208 = vadd.f32 %v936, %v1207
      %v1209 = vpop.f32.mrf.mxu0
      %1210 = vmatprep.mubr.f32.mxu0 %v814
      %1211 = vmatmul.mubr.f32.gmra.mxu0 %v813
      %v1212 = vpop.f32.mrf.mxu0
      %v1213 = vadd.f32 %v936, %v1212
      %v1214 = vpop.f32.mrf.mxu0
      %1215 = vmatprep.mubr.f32.mxu0 %v816
      %1216 = vmatmul.mubr.f32.gmra.mxu0 %v815
      %v1217 = vpop.f32.mrf.mxu0
      %v1218 = vadd.f32 %v936, %v1217
      %v1219 = vpop.f32.mrf.mxu0
      %1220 = vmatprep.mubr.f32.mxu0 %v818
      %1221 = vmatmul.mubr.f32.gmra.mxu0 %v817
      %v1222 = vpop.f32.mrf.mxu0
      %v1223 = vadd.f32 %v936, %v1222
      %v1224 = vpop.f32.mrf.mxu0
      %1225 = vmatprep.mubr.f32.mxu0 %v820
      %1226 = vmatmul.mubr.f32.gmra.mxu0 %v819
      %v1227 = vpop.f32.mrf.mxu0
      %v1228 = vadd.f32 %v936, %v1227
      %v1229 = vpop.f32.mrf.mxu0
      %1230 = vmatprep.mubr.f32.mxu0 %v822
      %1231 = vmatmul.mubr.f32.gmra.mxu0 %v821
      %v1232 = vpop.f32.mrf.mxu0
      %v1233 = vadd.f32 %v936, %v1232
      %v1234 = vpop.f32.mrf.mxu0
      %1235 = vmatprep.mubr.f32.mxu0 %v824
      %1236 = vmatmul.mubr.f32.gmra.mxu0 %v823
      %v1237 = vpop.f32.mrf.mxu0
      %v1238 = vadd.f32 %v936, %v1237
      %v1239 = vpop.f32.mrf.mxu0
      %1240 = vmatprep.mubr.f32.mxu0 %v826
      %1241 = vmatmul.mubr.f32.gmra.mxu0 %v825
      %v1242 = vpop.f32.mrf.mxu0
      %v1243 = vadd.f32 %v936, %v1242
      %v1244 = vpop.f32.mrf.mxu0
      %1245 = vdwg.mxu0
      %v1246 = vtanh.pop %v1007
      %v1247 = vtanh.pop %v1009
      %v1248 = vtanh.pop %v1168
      %v1249 = vtanh.pop %v1013
      %v1250 = vtanh.pop %v1015
      %v1251 = vtanh.pop %v1173
      %v1252 = vtanh.pop %v1019
      %v1253 = vtanh.pop %v1021
      %v1254 = vtanh.pop %v1178
      %v1255 = vtanh.pop %v1025
      %v1256 = vtanh.pop %v1027
      %v1257 = vtanh.pop %v1183
      %v1258 = vtanh.pop %v1031
      %v1259 = vtanh.pop %v1033
      %v1260 = vtanh.pop %v1188
      %v1261 = vtanh.pop %v1037
      %v1262 = vtanh.pop %v1039
      %v1263 = vtanh.pop %v1193
      %v1264 = vtanh.pop %v1043
      %v1265 = vtanh.pop %v1045
      %v1266 = vtanh.pop %v1198
      %v1267 = vtanh.pop %v1049
      %v1268 = vtanh.pop %v1051
      %v1269 = vtanh.pop %v1203
      %v1270 = vtanh.pop %v1055
      %v1271 = vtanh.pop %v1057
      %v1272 = vtanh.pop %v1208
      %v1273 = vtanh.pop %v1061
      %v1274 = vtanh.pop %v1063
      %v1275 = vtanh.pop %v1213
      %v1276 = vtanh.pop %v1067
      %v1277 = vtanh.pop %v1069
      %v1278 = vtanh.pop %v1218
      %v1279 = vtanh.pop %v1073
      %v1280 = vtanh.pop %v1075
      %v1281 = vtanh.pop %v1223
      %v1282 = vtanh.pop %v1079
      %v1283 = vtanh.pop %v1081
      %v1284 = vtanh.pop %v1228
      %v1285 = vtanh.pop %v1085
      %v1286 = vtanh.pop %v1087
      %v1287 = vtanh.pop %v1233
      %v1288 = vtanh.pop %v1091
      %v1289 = vtanh.pop %v1093
      %v1290 = vtanh.pop %v1238
      %v1291 = vtanh.pop %v1097
      %v1292 = vtanh.pop %v1099
      %v1293 = vtanh.pop %v1243
      %v1294 = vld [vmem:[%s7] sm:$0xff]
      %v1295 = vld [vmem:[%s7 + $0x8] sm:$0xff]
      %v1296 = vld [vmem:[%s7 + $0x10] sm:$0xff]
      %v1297 = vld [vmem:[%s7 + $0x18] sm:$0xff]
      %v1298 = vld [vmem:[%s7 + $0x20] sm:$0xff]
      %v1299 = vld [vmem:[%s7 + $0x28] sm:$0xff]
      %v1300 = vld [vmem:[%s7 + $0x30] sm:$0xff]
      %v1301 = vld [vmem:[%s7 + $0x38] sm:$0xff]
      %v1302 = vld [vmem:[%s7 + $0x40] sm:$0xff]
      %v1303 = vld [vmem:[%s7 + $0x48] sm:$0xff]
      %v1304 = vld [vmem:[%s7 + $0x50] sm:$0xff]
      %v1305 = vld [vmem:[%s7 + $0x58] sm:$0xff]
      %v1306 = vld [vmem:[%s7 + $0x60] sm:$0xff]
      %v1307 = vld [vmem:[%s7 + $0x68] sm:$0xff]
      %v1308 = vld [vmem:[%s7 + $0x70] sm:$0xff]
      %v1309 = vld [vmem:[%s7 + $0x78] sm:$0xff]
      %v1310 = vld [vmem:[%s7 + $0x80] sm:$0xff]
      %v1311 = vld [vmem:[%s7 + $0x88] sm:$0xff]
      %v1312 = vld [vmem:[%s7 + $0x90] sm:$0xff]
      %v1313 = vld [vmem:[%s7 + $0x98] sm:$0xff]
      %v1314 = vld [vmem:[%s7 + $0xa0] sm:$0xff]
      %v1315 = vld [vmem:[%s7 + $0xa8] sm:$0xff]
      %v1316 = vld [vmem:[%s7 + $0xb0] sm:$0xff]
      %v1317 = vld [vmem:[%s7 + $0xb8] sm:$0xff]
      %v1318 = vld [vmem:[%s7 + $0xc0] sm:$0xff]
      %v1319 = vld [vmem:[%s7 + $0xc8] sm:$0xff]
      %v1320 = vld [vmem:[%s7 + $0xd0] sm:$0xff]
      %v1321 = vld [vmem:[%s7 + $0xd8] sm:$0xff]
      %v1322 = vld [vmem:[%s7 + $0xe0] sm:$0xff]
      %v1323 = vld [vmem:[%s7 + $0xe8] sm:$0xff]
      %v1324 = vld [vmem:[%s7 + $0xf0] sm:$0xff]
      %v1325 = vld [vmem:[%s7 + $0xf8] sm:$0xff]
      %v1326 = vld [vmem:[%s7 + $0x100] sm:$0xff]
      %v1327 = vld [vmem:[%s7 + $0x108] sm:$0xff]
      %v1328 = vld [vmem:[%s7 + $0x110] sm:$0xff]
      %v1329 = vld [vmem:[%s7 + $0x118] sm:$0xff]
      %v1330 = vld [vmem:[%s7 + $0x120] sm:$0xff]
      %v1331 = vld [vmem:[%s7 + $0x128] sm:$0xff]
      %v1332 = vld [vmem:[%s7 + $0x130] sm:$0xff]
      %v1333 = vld [vmem:[%s7 + $0x138] sm:$0xff]
      %v1334 = vld [vmem:[%s7 + $0x140] sm:$0xff]
      %v1335 = vld [vmem:[%s7 + $0x148] sm:$0xff]
      %v1336 = vld [vmem:[%s7 + $0x150] sm:$0xff]
      %v1337 = vld [vmem:[%s7 + $0x158] sm:$0xff]
      %v1338 = vld [vmem:[%s7 + $0x160] sm:$0xff]
      %v1339 = vld [vmem:[%s7 + $0x168] sm:$0xff]
      %v1340 = vld [vmem:[%s7 + $0x170] sm:$0xff]
      %v1341 = vld [vmem:[%s7 + $0x178] sm:$0xff]
      %v1342 = vld [vmem:[%s7 + $0x180] sm:$0xff]
      %v1343 = vld [vmem:[%s7 + $0x188] sm:$0xff]
      %v1344 = vld [vmem:[%s7 + $0x190] sm:$0xff]
      %v1345 = vld [vmem:[%s7 + $0x198] sm:$0xff]
      %v1346 = vld [vmem:[%s7 + $0x1a0] sm:$0xff]
      %v1347 = vld [vmem:[%s7 + $0x1a8] sm:$0xff]
      %v1348 = vld [vmem:[%s7 + $0x1b0] sm:$0xff]
      %v1349 = vld [vmem:[%s7 + $0x1b8] sm:$0xff]
      %v1350 = vld [vmem:[%s7 + $0x1c0] sm:$0xff]
      %v1351 = vld [vmem:[%s7 + $0x1c8] sm:$0xff]
      %v1352 = vld [vmem:[%s7 + $0x1d0] sm:$0xff]
      %v1353 = vld [vmem:[%s7 + $0x1d8] sm:$0xff]
      %v1354 = vld [vmem:[%s7 + $0x1e0] sm:$0xff]
      %v1355 = vld [vmem:[%s7 + $0x1e8] sm:$0xff]
      %v1356 = vld [vmem:[%s7 + $0x1f0] sm:$0xff]
      %v1357 = vld [vmem:[%s7 + $0x1f8] sm:$0xff]
      %v1358 = vld [vmem:[%s7 + $0x200] sm:$0xff]
      %v1359 = vld [vmem:[%s7 + $0x208] sm:$0xff]
      %v1360 = vld [vmem:[%s7 + $0x210] sm:$0xff]
      %v1361 = vld [vmem:[%s7 + $0x218] sm:$0xff]
      %v1362 = vld [vmem:[%s7 + $0x220] sm:$0xff]
      %v1363 = vld [vmem:[%s7 + $0x228] sm:$0xff]
      %v1364 = vld [vmem:[%s7 + $0x230] sm:$0xff]
      %v1365 = vld [vmem:[%s7 + $0x238] sm:$0xff]
      %v1366 = vld [vmem:[%s7 + $0x240] sm:$0xff]
      %v1367 = vld [vmem:[%s7 + $0x248] sm:$0xff]
      %v1368 = vld [vmem:[%s7 + $0x250] sm:$0xff]
      %v1369 = vld [vmem:[%s7 + $0x258] sm:$0xff]
      %v1370 = vld [vmem:[%s7 + $0x260] sm:$0xff]
      %v1371 = vld [vmem:[%s7 + $0x268] sm:$0xff]
      %v1372 = vld [vmem:[%s7 + $0x270] sm:$0xff]
      %v1373 = vld [vmem:[%s7 + $0x278] sm:$0xff]
      %v1374 = vld [vmem:[%s7 + $0x280] sm:$0xff]
      %v1375 = vld [vmem:[%s7 + $0x288] sm:$0xff]
      %v1376 = vld [vmem:[%s7 + $0x290] sm:$0xff]
      %v1377 = vld [vmem:[%s7 + $0x298] sm:$0xff]
      %v1378 = vld [vmem:[%s7 + $0x2a0] sm:$0xff]
      %v1379 = vld [vmem:[%s7 + $0x2a8] sm:$0xff]
      %v1380 = vld [vmem:[%s7 + $0x2b0] sm:$0xff]
      %v1381 = vld [vmem:[%s7 + $0x2b8] sm:$0xff]
      %v1382 = vld [vmem:[%s7 + $0x2c0] sm:$0xff]
      %v1383 = vld [vmem:[%s7 + $0x2c8] sm:$0xff]
      %v1384 = vld [vmem:[%s7 + $0x2d0] sm:$0xff]
      %v1385 = vld [vmem:[%s7 + $0x2d8] sm:$0xff]
      %v1386 = vld [vmem:[%s7 + $0x2e0] sm:$0xff]
      %v1387 = vld [vmem:[%s7 + $0x2e8] sm:$0xff]
      %v1388 = vld [vmem:[%s7 + $0x2f0] sm:$0xff]
      %v1389 = vld [vmem:[%s7 + $0x2f8] sm:$0xff]
      %v1390 = vld [vmem:[%s8] sm:$0x3]
      %v1392 = vlaneseq
      %v1393 = vshrl.u32 %v1392, 7
      %v1394 = vsub.s32 0, %v1393
      %v1395 = vrot.slane %v1390, %v1394
      %v1396 = vlaneseq
      %v1397 = vshrl.u32 %v1396, 7
      %v1398 = vsub.s32 1, %v1397
      %v1399 = vrot.slane %v1390, %v1398
      %1402 = vmatprep.subr.mxu0 %v1325
      %1403 = vmatpush1.msra.mxu0 %v1324
      %1404 = vmatprep.subr.mxu0 %v1323
      %1405 = vmatpush1.msra.mxu0 %v1322
      %1406 = vmatprep.subr.mxu0 %v1321
      %1407 = vmatpush1.msra.mxu0 %v1320
      %1408 = vmatprep.subr.mxu0 %v1319
      %1409 = vmatpush1.msra.mxu0 %v1318
      %1410 = vmatprep.subr.mxu0 %v1317
      %1411 = vmatpush1.msra.mxu0 %v1316
      %1412 = vmatprep.subr.mxu0 %v1315
      %1413 = vmatpush1.msra.mxu0 %v1314
      %1414 = vmatprep.subr.mxu0 %v1313
      %1415 = vmatpush1.msra.mxu0 %v1312
      %1416 = vmatprep.subr.mxu0 %v1311
      %1417 = vmatpush1.msra.mxu0 %v1310
      %1418 = vmatprep.subr.mxu0 %v1309
      %1419 = vmatpush1.msra.mxu0 %v1308
      %1420 = vmatprep.subr.mxu0 %v1307
      %1421 = vmatpush1.msra.mxu0 %v1306
      %1422 = vmatprep.subr.mxu0 %v1305
      %1423 = vmatpush1.msra.mxu0 %v1304
      %1424 = vmatprep.subr.mxu0 %v1303
      %1425 = vmatpush1.msra.mxu0 %v1302
      %1426 = vmatprep.subr.mxu0 %v1301
      %1427 = vmatpush1.msra.mxu0 %v1300
      %1428 = vmatprep.subr.mxu0 %v1299
      %1429 = vmatpush1.msra.mxu0 %v1298
      %1430 = vmatprep.subr.mxu0 %v1297
      %1431 = vmatpush1.msra.mxu0 %v1296
      %1432 = vmatprep.subr.mxu0 %v1295
      %1433 = vmatpush1.msra.mxu0 %v1294
      %1434 = vmatprep.subr.mxu0 %v1357
      %1435 = vmatpush2.msra.mxu0 %v1356
      %1436 = vmatprep.subr.mxu0 %v1355
      %1437 = vmatpush2.msra.mxu0 %v1354
      %1438 = vmatprep.subr.mxu0 %v1353
      %1439 = vmatpush2.msra.mxu0 %v1352
      %1440 = vmatprep.subr.mxu0 %v1351
      %1441 = vmatpush2.msra.mxu0 %v1350
      %1442 = vmatprep.subr.mxu0 %v1349
      %1443 = vmatpush2.msra.mxu0 %v1348
      %1444 = vmatprep.subr.mxu0 %v1347
      %1445 = vmatpush2.msra.mxu0 %v1346
      %1446 = vmatprep.subr.mxu0 %v1345
      %1447 = vmatpush2.msra.mxu0 %v1344
      %1448 = vmatprep.subr.mxu0 %v1343
      %1449 = vmatpush2.msra.mxu0 %v1342
      %1450 = vmatprep.subr.mxu0 %v1341
      %1451 = vmatpush2.msra.mxu0 %v1340
      %1452 = vmatprep.subr.mxu0 %v1339
      %1453 = vmatpush2.msra.mxu0 %v1338
      %1454 = vmatprep.subr.mxu0 %v1337
      %1455 = vmatpush2.msra.mxu0 %v1336
      %1456 = vmatprep.subr.mxu0 %v1335
      %1457 = vmatpush2.msra.mxu0 %v1334
      %1458 = vmatprep.subr.mxu0 %v1333
      %1459 = vmatpush2.msra.mxu0 %v1332
      %1460 = vmatprep.subr.mxu0 %v1331
      %1461 = vmatpush2.msra.mxu0 %v1330
      %1462 = vmatprep.subr.mxu0 %v1329
      %1463 = vmatpush2.msra.mxu0 %v1328
      %1464 = vmatprep.subr.mxu0 %v1327
      %1465 = vmatpush2.msra.mxu0 %v1326
      %1466 = vmatprep.mubr.f32.mxu0 %v1247
      %1467 = vmatmul.mubr.f32.gmra.mxu0 %v1246
      %v1468 = vpop.f32.mrf.mxu0
      %v1469 = vadd.f32 %v1395, %v1468
      %v1470 = vpop.f32.mrf.mxu0
      %v1471 = vadd.f32 %v1399, %v1470
      %1472 = vmatprep.mubr.f32.mxu0 %v1250
      %1473 = vmatmul.mubr.f32.gmra.mxu0 %v1249
      %v1474 = vpop.f32.mrf.mxu0
      %v1475 = vadd.f32 %v1395, %v1474
      %v1476 = vpop.f32.mrf.mxu0
      %v1477 = vadd.f32 %v1399, %v1476
      %1478 = vmatprep.mubr.f32.mxu0 %v1253
      %1479 = vmatmul.mubr.f32.gmra.mxu0 %v1252
      %v1480 = vpop.f32.mrf.mxu0
      %v1481 = vadd.f32 %v1395, %v1480
      %v1482 = vpop.f32.mrf.mxu0
      %v1483 = vadd.f32 %v1399, %v1482
      %1484 = vmatprep.mubr.f32.mxu0 %v1256
      %1485 = vmatmul.mubr.f32.gmra.mxu0 %v1255
      %v1486 = vpop.f32.mrf.mxu0
      %v1487 = vadd.f32 %v1395, %v1486
      %v1488 = vpop.f32.mrf.mxu0
      %v1489 = vadd.f32 %v1399, %v1488
      %1490 = vmatprep.mubr.f32.mxu0 %v1259
      %1491 = vmatmul.mubr.f32.gmra.mxu0 %v1258
      %v1492 = vpop.f32.mrf.mxu0
      %v1493 = vadd.f32 %v1395, %v1492
      %v1494 = vpop.f32.mrf.mxu0
      %v1495 = vadd.f32 %v1399, %v1494
      %1496 = vmatprep.mubr.f32.mxu0 %v1262
      %1497 = vmatmul.mubr.f32.gmra.mxu0 %v1261
      %v1498 = vpop.f32.mrf.mxu0
      %v1499 = vadd.f32 %v1395, %v1498
      %v1500 = vpop.f32.mrf.mxu0
      %v1501 = vadd.f32 %v1399, %v1500
      %1502 = vmatprep.mubr.f32.mxu0 %v1265
      %1503 = vmatmul.mubr.f32.gmra.mxu0 %v1264
      %v1504 = vpop.f32.mrf.mxu0
      %v1505 = vadd.f32 %v1395, %v1504
      %v1506 = vpop.f32.mrf.mxu0
      %v1507 = vadd.f32 %v1399, %v1506
      %1508 = vmatprep.mubr.f32.mxu0 %v1268
      %1509 = vmatmul.mubr.f32.gmra.mxu0 %v1267
      %v1510 = vpop.f32.mrf.mxu0
      %v1511 = vadd.f32 %v1395, %v1510
      %v1512 = vpop.f32.mrf.mxu0
      %v1513 = vadd.f32 %v1399, %v1512
      %1514 = vmatprep.mubr.f32.mxu0 %v1271
      %1515 = vmatmul.mubr.f32.gmra.mxu0 %v1270
      %v1516 = vpop.f32.mrf.mxu0
      %v1517 = vadd.f32 %v1395, %v1516
      %v1518 = vpop.f32.mrf.mxu0
      %v1519 = vadd.f32 %v1399, %v1518
      %1520 = vmatprep.mubr.f32.mxu0 %v1274
      %1521 = vmatmul.mubr.f32.gmra.mxu0 %v1273
      %v1522 = vpop.f32.mrf.mxu0
      %v1523 = vadd.f32 %v1395, %v1522
      %v1524 = vpop.f32.mrf.mxu0
      %v1525 = vadd.f32 %v1399, %v1524
      %1526 = vmatprep.mubr.f32.mxu0 %v1277
      %1527 = vmatmul.mubr.f32.gmra.mxu0 %v1276
      %v1528 = vpop.f32.mrf.mxu0
      %v1529 = vadd.f32 %v1395, %v1528
      %v1530 = vpop.f32.mrf.mxu0
      %v1531 = vadd.f32 %v1399, %v1530
      %1532 = vmatprep.mubr.f32.mxu0 %v1280
      %1533 = vmatmul.mubr.f32.gmra.mxu0 %v1279
      %v1534 = vpop.f32.mrf.mxu0
      %v1535 = vadd.f32 %v1395, %v1534
      %v1536 = vpop.f32.mrf.mxu0
      %v1537 = vadd.f32 %v1399, %v1536
      %1538 = vmatprep.mubr.f32.mxu0 %v1283
      %1539 = vmatmul.mubr.f32.gmra.mxu0 %v1282
      %v1540 = vpop.f32.mrf.mxu0
      %v1541 = vadd.f32 %v1395, %v1540
      %v1542 = vpop.f32.mrf.mxu0
      %v1543 = vadd.f32 %v1399, %v1542
      %1544 = vmatprep.mubr.f32.mxu0 %v1286
      %1545 = vmatmul.mubr.f32.gmra.mxu0 %v1285
      %v1546 = vpop.f32.mrf.mxu0
      %v1547 = vadd.f32 %v1395, %v1546
      %v1548 = vpop.f32.mrf.mxu0
      %v1549 = vadd.f32 %v1399, %v1548
      %1550 = vmatprep.mubr.f32.mxu0 %v1289
      %1551 = vmatmul.mubr.f32.gmra.mxu0 %v1288
      %v1552 = vpop.f32.mrf.mxu0
      %v1553 = vadd.f32 %v1395, %v1552
      %v1554 = vpop.f32.mrf.mxu0
      %v1555 = vadd.f32 %v1399, %v1554
      %1556 = vmatprep.mubr.f32.mxu0 %v1292
      %1557 = vmatmul.mubr.f32.gmra.mxu0 %v1291
      %v1558 = vpop.f32.mrf.mxu0
      %v1559 = vadd.f32 %v1395, %v1558
      %v1560 = vpop.f32.mrf.mxu0
      %v1561 = vadd.f32 %v1399, %v1560
      %1562 = vdwg.mxu0
      %1563 = vmatprep.subr.mxu0 %v1389
      %1564 = vmatpush1.msra.mxu0 %v1388
      %1565 = vmatprep.subr.mxu0 %v1387
      %1566 = vmatpush1.msra.mxu0 %v1386
      %1567 = vmatprep.subr.mxu0 %v1385
      %1568 = vmatpush1.msra.mxu0 %v1384
      %1569 = vmatprep.subr.mxu0 %v1383
      %1570 = vmatpush1.msra.mxu0 %v1382
      %1571 = vmatprep.subr.mxu0 %v1381
      %1572 = vmatpush1.msra.mxu0 %v1380
      %1573 = vmatprep.subr.mxu0 %v1379
      %1574 = vmatpush1.msra.mxu0 %v1378
      %1575 = vmatprep.subr.mxu0 %v1377
      %1576 = vmatpush1.msra.mxu0 %v1376
      %1577 = vmatprep.subr.mxu0 %v1375
      %1578 = vmatpush1.msra.mxu0 %v1374
      %1579 = vmatprep.subr.mxu0 %v1373
      %1580 = vmatpush1.msra.mxu0 %v1372
      %1581 = vmatprep.subr.mxu0 %v1371
      %1582 = vmatpush1.msra.mxu0 %v1370
      %1583 = vmatprep.subr.mxu0 %v1369
      %1584 = vmatpush1.msra.mxu0 %v1368
      %1585 = vmatprep.subr.mxu0 %v1367
      %1586 = vmatpush1.msra.mxu0 %v1366
      %1587 = vmatprep.subr.mxu0 %v1365
      %1588 = vmatpush1.msra.mxu0 %v1364
      %1589 = vmatprep.subr.mxu0 %v1363
      %1590 = vmatpush1.msra.mxu0 %v1362
      %1591 = vmatprep.subr.mxu0 %v1361
      %1592 = vmatpush1.msra.mxu0 %v1360
      %1593 = vmatprep.subr.mxu0 %v1359
      %1594 = vmatpush1.msra.mxu0 %v1358
      %1595 = vmatprep.subr.mxu0 0.0
      %1596 = vmatpush2.msra.mxu0 0.0
      %1597 = vmatprep.subr.mxu0 0.0
      %1598 = vmatpush2.msra.mxu0 0.0
      %1599 = vmatprep.subr.mxu0 0.0
      %1600 = vmatpush2.msra.mxu0 0.0
      %1601 = vmatprep.subr.mxu0 0.0
      %1602 = vmatpush2.msra.mxu0 0.0
      %1603 = vmatprep.subr.mxu0 0.0
      %1604 = vmatpush2.msra.mxu0 0.0
      %1605 = vmatprep.subr.mxu0 0.0
      %1606 = vmatpush2.msra.mxu0 0.0
      %1607 = vmatprep.subr.mxu0 0.0
      %1608 = vmatpush2.msra.mxu0 0.0
      %1609 = vmatprep.subr.mxu0 0.0
      %1610 = vmatpush2.msra.mxu0 0.0
      %1611 = vmatprep.subr.mxu0 0.0
      %1612 = vmatpush2.msra.mxu0 0.0
      %1613 = vmatprep.subr.mxu0 0.0
      %1614 = vmatpush2.msra.mxu0 0.0
      %1615 = vmatprep.subr.mxu0 0.0
      %1616 = vmatpush2.msra.mxu0 0.0
      %1617 = vmatprep.subr.mxu0 0.0
      %1618 = vmatpush2.msra.mxu0 0.0
      %1619 = vmatprep.subr.mxu0 0.0
      %1620 = vmatpush2.msra.mxu0 0.0
      %1621 = vmatprep.subr.mxu0 0.0
      %1622 = vmatpush2.msra.mxu0 0.0
      %1623 = vmatprep.subr.mxu0 0.0
      %1624 = vmatpush2.msra.mxu0 0.0
      %1625 = vmatprep.subr.mxu0 0.0
      %1626 = vmatpush2.msra.mxu0 0.0
      %1627 = vmatprep.mubr.f32.mxu0 0.0
      %1628 = vmatmul.mubr.f32.gmra.mxu0 %v1248
      %v1629 = vpop.f32.mrf.mxu0
      %v1630 = vadd.f32 %v1469, %v1629
      %v1631 = vpop.f32.mrf.mxu0
      %v1632 = vadd.f32 %v1471, %v1631
      %1633 = vmatprep.mubr.f32.mxu0 0.0
      %1634 = vmatmul.mubr.f32.gmra.mxu0 %v1251
      %v1635 = vpop.f32.mrf.mxu0
      %v1636 = vadd.f32 %v1475, %v1635
      %v1637 = vpop.f32.mrf.mxu0
      %v1638 = vadd.f32 %v1477, %v1637
      %1639 = vmatprep.mubr.f32.mxu0 0.0
      %1640 = vmatmul.mubr.f32.gmra.mxu0 %v1254
      %v1641 = vpop.f32.mrf.mxu0
      %v1642 = vadd.f32 %v1481, %v1641
      %v1643 = vpop.f32.mrf.mxu0
      %v1644 = vadd.f32 %v1483, %v1643
      %1645 = vmatprep.mubr.f32.mxu0 0.0
      %1646 = vmatmul.mubr.f32.gmra.mxu0 %v1257
      %v1647 = vpop.f32.mrf.mxu0
      %v1648 = vadd.f32 %v1487, %v1647
      %v1649 = vpop.f32.mrf.mxu0
      %v1650 = vadd.f32 %v1489, %v1649
      %1651 = vmatprep.mubr.f32.mxu0 0.0
      %1652 = vmatmul.mubr.f32.gmra.mxu0 %v1260
      %v1653 = vpop.f32.mrf.mxu0
      %v1654 = vadd.f32 %v1493, %v1653
      %v1655 = vpop.f32.mrf.mxu0
      %v1656 = vadd.f32 %v1495, %v1655
      %1657 = vmatprep.mubr.f32.mxu0 0.0
      %1658 = vmatmul.mubr.f32.gmra.mxu0 %v1263
      %v1659 = vpop.f32.mrf.mxu0
      %v1660 = vadd.f32 %v1499, %v1659
      %v1661 = vpop.f32.mrf.mxu0
      %v1662 = vadd.f32 %v1501, %v1661
      %1663 = vmatprep.mubr.f32.mxu0 0.0
      %1664 = vmatmul.mubr.f32.gmra.mxu0 %v1266
      %v1665 = vpop.f32.mrf.mxu0
      %v1666 = vadd.f32 %v1505, %v1665
      %v1667 = vpop.f32.mrf.mxu0
      %v1668 = vadd.f32 %v1507, %v1667
      %1669 = vmatprep.mubr.f32.mxu0 0.0
      %1670 = vmatmul.mubr.f32.gmra.mxu0 %v1269
      %v1671 = vpop.f32.mrf.mxu0
      %v1672 = vadd.f32 %v1511, %v1671
      %v1673 = vpop.f32.mrf.mxu0
      %v1674 = vadd.f32 %v1513, %v1673
      %1675 = vmatprep.mubr.f32.mxu0 0.0
      %1676 = vmatmul.mubr.f32.gmra.mxu0 %v1272
      %v1677 = vpop.f32.mrf.mxu0
      %v1678 = vadd.f32 %v1517, %v1677
      %v1679 = vpop.f32.mrf.mxu0
      %v1680 = vadd.f32 %v1519, %v1679
      %1681 = vmatprep.mubr.f32.mxu0 0.0
      %1682 = vmatmul.mubr.f32.gmra.mxu0 %v1275
      %v1683 = vpop.f32.mrf.mxu0
      %v1684 = vadd.f32 %v1523, %v1683
      %v1685 = vpop.f32.mrf.mxu0
      %v1686 = vadd.f32 %v1525, %v1685
      %1687 = vmatprep.mubr.f32.mxu0 0.0
      %1688 = vmatmul.mubr.f32.gmra.mxu0 %v1278
      %v1689 = vpop.f32.mrf.mxu0
      %v1690 = vadd.f32 %v1529, %v1689
      %v1691 = vpop.f32.mrf.mxu0
      %v1692 = vadd.f32 %v1531, %v1691
      %1693 = vmatprep.mubr.f32.mxu0 0.0
      %1694 = vmatmul.mubr.f32.gmra.mxu0 %v1281
      %v1695 = vpop.f32.mrf.mxu0
      %v1696 = vadd.f32 %v1535, %v1695
      %v1697 = vpop.f32.mrf.mxu0
      %v1698 = vadd.f32 %v1537, %v1697
      %1699 = vmatprep.mubr.f32.mxu0 0.0
      %1700 = vmatmul.mubr.f32.gmra.mxu0 %v1284
      %v1701 = vpop.f32.mrf.mxu0
      %v1702 = vadd.f32 %v1541, %v1701
      %v1703 = vpop.f32.mrf.mxu0
      %v1704 = vadd.f32 %v1543, %v1703
      %1705 = vmatprep.mubr.f32.mxu0 0.0
      %1706 = vmatmul.mubr.f32.gmra.mxu0 %v1287
      %v1707 = vpop.f32.mrf.mxu0
      %v1708 = vadd.f32 %v1547, %v1707
      %v1709 = vpop.f32.mrf.mxu0
      %v1710 = vadd.f32 %v1549, %v1709
      %1711 = vmatprep.mubr.f32.mxu0 0.0
      %1712 = vmatmul.mubr.f32.gmra.mxu0 %v1290
      %v1713 = vpop.f32.mrf.mxu0
      %v1714 = vadd.f32 %v1553, %v1713
      %v1715 = vpop.f32.mrf.mxu0
      %v1716 = vadd.f32 %v1555, %v1715
      %1717 = vmatprep.mubr.f32.mxu0 0.0
      %1718 = vmatmul.mubr.f32.gmra.mxu0 %v1293
      %v1719 = vpop.f32.mrf.mxu0
      %v1720 = vadd.f32 %v1559, %v1719
      %v1721 = vpop.f32.mrf.mxu0
      %v1722 = vadd.f32 %v1561, %v1721
      %1723 = vdwg.mxu0
      %v1724 = vtanh.pop %v1630
      %v1725 = vtanh.pop %v1632
      %v1726 = vtanh.pop %v1636
      %v1727 = vtanh.pop %v1638
      %v1728 = vtanh.pop %v1642
      %v1729 = vtanh.pop %v1644
      %v1730 = vtanh.pop %v1648
      %v1731 = vtanh.pop %v1650
      %v1732 = vtanh.pop %v1654
      %v1733 = vtanh.pop %v1656
      %v1734 = vtanh.pop %v1660
      %v1735 = vtanh.pop %v1662
      %v1736 = vtanh.pop %v1666
      %v1737 = vtanh.pop %v1668
      %v1738 = vtanh.pop %v1672
      %v1739 = vtanh.pop %v1674
      %v1740 = vtanh.pop %v1678
      %v1741 = vtanh.pop %v1680
      %v1742 = vtanh.pop %v1684
      %v1743 = vtanh.pop %v1686
      %v1744 = vtanh.pop %v1690
      %v1745 = vtanh.pop %v1692
      %v1746 = vtanh.pop %v1696
      %v1747 = vtanh.pop %v1698
      %v1748 = vtanh.pop %v1702
      %v1749 = vtanh.pop %v1704
      %v1750 = vtanh.pop %v1708
      %v1751 = vtanh.pop %v1710
      %v1752 = vtanh.pop %v1714
      %v1753 = vtanh.pop %v1716
      %v1754 = vtanh.pop %v1720
      %v1755 = vtanh.pop %v1722
      %v1756 = vld [vmem:[%s9] sm:$0xff]
      %v1757 = vld [vmem:[%s9 + $0x8] sm:$0xff]
      %v1758 = vld [vmem:[%s9 + $0x10] sm:$0xff]
      %v1759 = vld [vmem:[%s9 + $0x18] sm:$0xff]
      %v1760 = vld [vmem:[%s9 + $0x20] sm:$0xff]
      %v1761 = vld [vmem:[%s9 + $0x28] sm:$0xff]
      %v1762 = vld [vmem:[%s9 + $0x30] sm:$0xff]
      %v1763 = vld [vmem:[%s9 + $0x38] sm:$0xff]
      %v1764 = vld [vmem:[%s9 + $0x40] sm:$0xff]
      %v1765 = vld [vmem:[%s9 + $0x48] sm:$0xff]
      %v1766 = vld [vmem:[%s9 + $0x50] sm:$0xff]
      %v1767 = vld [vmem:[%s9 + $0x58] sm:$0xff]
      %v1768 = vld [vmem:[%s9 + $0x60] sm:$0xff]
      %v1769 = vld [vmem:[%s9 + $0x68] sm:$0xff]
      %v1770 = vld [vmem:[%s9 + $0x70] sm:$0xff]
      %v1771 = vld [vmem:[%s9 + $0x78] sm:$0xff]
      %v1772 = vld [vmem:[%s9 + $0x80] sm:$0xff]
      %v1773 = vld [vmem:[%s9 + $0x88] sm:$0xff]
      %v1774 = vld [vmem:[%s9 + $0x90] sm:$0xff]
      %v1775 = vld [vmem:[%s9 + $0x98] sm:$0xff]
      %v1776 = vld [vmem:[%s9 + $0xa0] sm:$0xff]
      %v1777 = vld [vmem:[%s9 + $0xa8] sm:$0xff]
      %v1778 = vld [vmem:[%s9 + $0xb0] sm:$0xff]
      %v1779 = vld [vmem:[%s9 + $0xb8] sm:$0xff]
      %v1780 = vld [vmem:[%s9 + $0xc0] sm:$0xff]
      %v1781 = vld [vmem:[%s9 + $0xc8] sm:$0xff]
      %v1782 = vld [vmem:[%s9 + $0xd0] sm:$0xff]
      %v1783 = vld [vmem:[%s9 + $0xd8] sm:$0xff]
      %v1784 = vld [vmem:[%s9 + $0xe0] sm:$0xff]
      %v1785 = vld [vmem:[%s9 + $0xe8] sm:$0xff]
      %v1786 = vld [vmem:[%s9 + $0xf0] sm:$0xff]
      %v1787 = vld [vmem:[%s9 + $0xf8] sm:$0xff]
      %v1788 = vld [vmem:[%s10] sm:$0x1]
      %v1790 = vlaneseq
      %v1791 = vshrl.u32 %v1790, 7
      %v1792 = vsub.s32 0, %v1791
      %v1793 = vrot.slane %v1788, %v1792
      %1795 = vmatprep.subr.mxu0 0.0
      %1796 = vmatpush1.msra.mxu0 %v1771
      %1797 = vmatprep.subr.mxu0 0.0
      %1798 = vmatpush1.msra.mxu0 %v1770
      %1799 = vmatprep.subr.mxu0 0.0
      %1800 = vmatpush1.msra.mxu0 %v1769
      %1801 = vmatprep.subr.mxu0 0.0
      %1802 = vmatpush1.msra.mxu0 %v1768
      %1803 = vmatprep.subr.mxu0 0.0
      %1804 = vmatpush1.msra.mxu0 %v1767
      %1805 = vmatprep.subr.mxu0 0.0
      %1806 = vmatpush1.msra.mxu0 %v1766
      %1807 = vmatprep.subr.mxu0 0.0
      %1808 = vmatpush1.msra.mxu0 %v1765
      %1809 = vmatprep.subr.mxu0 0.0
      %1810 = vmatpush1.msra.mxu0 %v1764
      %1811 = vmatprep.subr.mxu0 0.0
      %1812 = vmatpush1.msra.mxu0 %v1763
      %1813 = vmatprep.subr.mxu0 0.0
      %1814 = vmatpush1.msra.mxu0 %v1762
      %1815 = vmatprep.subr.mxu0 0.0
      %1816 = vmatpush1.msra.mxu0 %v1761
      %1817 = vmatprep.subr.mxu0 0.0
      %1818 = vmatpush1.msra.mxu0 %v1760
      %1819 = vmatprep.subr.mxu0 0.0
      %1820 = vmatpush1.msra.mxu0 %v1759
      %1821 = vmatprep.subr.mxu0 0.0
      %1822 = vmatpush1.msra.mxu0 %v1758
      %1823 = vmatprep.subr.mxu0 0.0
      %1824 = vmatpush1.msra.mxu0 %v1757
      %1825 = vmatprep.subr.mxu0 0.0
      %1826 = vmatpush1.msra.mxu0 %v1756
      %1827 = vmatprep.subr.mxu0 0.0
      %1828 = vmatpush2.msra.mxu0 %v1787
      %1829 = vmatprep.subr.mxu0 0.0
      %1830 = vmatpush2.msra.mxu0 %v1786
      %1831 = vmatprep.subr.mxu0 0.0
      %1832 = vmatpush2.msra.mxu0 %v1785
      %1833 = vmatprep.subr.mxu0 0.0
      %1834 = vmatpush2.msra.mxu0 %v1784
      %1835 = vmatprep.subr.mxu0 0.0
      %1836 = vmatpush2.msra.mxu0 %v1783
      %1837 = vmatprep.subr.mxu0 0.0
      %1838 = vmatpush2.msra.mxu0 %v1782
      %1839 = vmatprep.subr.mxu0 0.0
      %1840 = vmatpush2.msra.mxu0 %v1781
      %1841 = vmatprep.subr.mxu0 0.0
      %1842 = vmatpush2.msra.mxu0 %v1780
      %1843 = vmatprep.subr.mxu0 0.0
      %1844 = vmatpush2.msra.mxu0 %v1779
      %1845 = vmatprep.subr.mxu0 0.0
      %1846 = vmatpush2.msra.mxu0 %v1778
      %1847 = vmatprep.subr.mxu0 0.0
      %1848 = vmatpush2.msra.mxu0 %v1777
      %1849 = vmatprep.subr.mxu0 0.0
      %1850 = vmatpush2.msra.mxu0 %v1776
      %1851 = vmatprep.subr.mxu0 0.0
      %1852 = vmatpush2.msra.mxu0 %v1775
      %1853 = vmatprep.subr.mxu0 0.0
      %1854 = vmatpush2.msra.mxu0 %v1774
      %1855 = vmatprep.subr.mxu0 0.0
      %1856 = vmatpush2.msra.mxu0 %v1773
      %1857 = vmatprep.subr.mxu0 0.0
      %1858 = vmatpush2.msra.mxu0 %v1772
      %1859 = vmatprep.mubr.f32.mxu0 %v1725
      %1860 = vmatmul.mubr.f32.gmra.mxu0 %v1724
      %v1861 = vpop.f32.mrf.mxu0
      %v1862 = vadd.f32 %v1793, %v1861
      %v1863 = vpop.f32.mrf.mxu0
      %1864 = vmatprep.mubr.f32.mxu0 %v1727
      %1865 = vmatmul.mubr.f32.gmra.mxu0 %v1726
      %v1866 = vpop.f32.mrf.mxu0
      %v1867 = vadd.f32 %v1793, %v1866
      %v1868 = vpop.f32.mrf.mxu0
      %1869 = vmatprep.mubr.f32.mxu0 %v1729
      %1870 = vmatmul.mubr.f32.gmra.mxu0 %v1728
      %v1871 = vpop.f32.mrf.mxu0
      %v1872 = vadd.f32 %v1793, %v1871
      %v1873 = vpop.f32.mrf.mxu0
      %1874 = vmatprep.mubr.f32.mxu0 %v1731
      %1875 = vmatmul.mubr.f32.gmra.mxu0 %v1730
      %v1876 = vpop.f32.mrf.mxu0
      %v1877 = vadd.f32 %v1793, %v1876
      %v1878 = vpop.f32.mrf.mxu0
      %1879 = vmatprep.mubr.f32.mxu0 %v1733
      %1880 = vmatmul.mubr.f32.gmra.mxu0 %v1732
      %v1881 = vpop.f32.mrf.mxu0
      %v1882 = vadd.f32 %v1793, %v1881
      %v1883 = vpop.f32.mrf.mxu0
      %1884 = vmatprep.mubr.f32.mxu0 %v1735
      %1885 = vmatmul.mubr.f32.gmra.mxu0 %v1734
      %v1886 = vpop.f32.mrf.mxu0
      %v1887 = vadd.f32 %v1793, %v1886
      %v1888 = vpop.f32.mrf.mxu0
      %1889 = vmatprep.mubr.f32.mxu0 %v1737
      %1890 = vmatmul.mubr.f32.gmra.mxu0 %v1736
      %v1891 = vpop.f32.mrf.mxu0
      %v1892 = vadd.f32 %v1793, %v1891
      %v1893 = vpop.f32.mrf.mxu0
      %1894 = vmatprep.mubr.f32.mxu0 %v1739
      %1895 = vmatmul.mubr.f32.gmra.mxu0 %v1738
      %v1896 = vpop.f32.mrf.mxu0
      %v1897 = vadd.f32 %v1793, %v1896
      %v1898 = vpop.f32.mrf.mxu0
      %1899 = vmatprep.mubr.f32.mxu0 %v1741
      %1900 = vmatmul.mubr.f32.gmra.mxu0 %v1740
      %v1901 = vpop.f32.mrf.mxu0
      %v1902 = vadd.f32 %v1793, %v1901
      %v1903 = vpop.f32.mrf.mxu0
      %1904 = vmatprep.mubr.f32.mxu0 %v1743
      %1905 = vmatmul.mubr.f32.gmra.mxu0 %v1742
      %v1906 = vpop.f32.mrf.mxu0
      %v1907 = vadd.f32 %v1793, %v1906
      %v1908 = vpop.f32.mrf.mxu0
      %1909 = vmatprep.mubr.f32.mxu0 %v1745
      %1910 = vmatmul.mubr.f32.gmra.mxu0 %v1744
      %v1911 = vpop.f32.mrf.mxu0
      %v1912 = vadd.f32 %v1793, %v1911
      %v1913 = vpop.f32.mrf.mxu0
      %1914 = vmatprep.mubr.f32.mxu0 %v1747
      %1915 = vmatmul.mubr.f32.gmra.mxu0 %v1746
      %v1916 = vpop.f32.mrf.mxu0
      %v1917 = vadd.f32 %v1793, %v1916
      %v1918 = vpop.f32.mrf.mxu0
      %1919 = vmatprep.mubr.f32.mxu0 %v1749
      %1920 = vmatmul.mubr.f32.gmra.mxu0 %v1748
      %v1921 = vpop.f32.mrf.mxu0
      %v1922 = vadd.f32 %v1793, %v1921
      %v1923 = vpop.f32.mrf.mxu0
      %1924 = vmatprep.mubr.f32.mxu0 %v1751
      %1925 = vmatmul.mubr.f32.gmra.mxu0 %v1750
      %v1926 = vpop.f32.mrf.mxu0
      %v1927 = vadd.f32 %v1793, %v1926
      %v1928 = vpop.f32.mrf.mxu0
      %1929 = vmatprep.mubr.f32.mxu0 %v1753
      %1930 = vmatmul.mubr.f32.gmra.mxu0 %v1752
      %v1931 = vpop.f32.mrf.mxu0
      %v1932 = vadd.f32 %v1793, %v1931
      %v1933 = vpop.f32.mrf.mxu0
      %1934 = vmatprep.mubr.f32.mxu0 %v1755
      %1935 = vmatmul.mubr.f32.gmra.mxu0 %v1754
      %v1936 = vpop.f32.mrf.mxu0
      %v1937 = vadd.f32 %v1793, %v1936
      %v1938 = vpop.f32.mrf.mxu0
      %1939 = vdwg.mxu0
      %vm1940 = vcmask 130048
      %1941 = vst.msk [vmem:[%s388] sm:$0xff] %vm1940, %v1862
      %1942 = vst.msk [vmem:[%s388 + $0x8] sm:$0xff] %vm1940, %v1867
      %1943 = vst.msk [vmem:[%s388 + $0x10] sm:$0xff] %vm1940, %v1872
      %1944 = vst.msk [vmem:[%s388 + $0x18] sm:$0xff] %vm1940, %v1877
      %1945 = vst.msk [vmem:[%s388 + $0x20] sm:$0xff] %vm1940, %v1882
      %1946 = vst.msk [vmem:[%s388 + $0x28] sm:$0xff] %vm1940, %v1887
      %1947 = vst.msk [vmem:[%s388 + $0x30] sm:$0xff] %vm1940, %v1892
      %1948 = vst.msk [vmem:[%s388 + $0x38] sm:$0xff] %vm1940, %v1897
      %1949 = vst.msk [vmem:[%s388 + $0x40] sm:$0xff] %vm1940, %v1902
      %1950 = vst.msk [vmem:[%s388 + $0x48] sm:$0xff] %vm1940, %v1907
      %1951 = vst.msk [vmem:[%s388 + $0x50] sm:$0xff] %vm1940, %v1912
      %1952 = vst.msk [vmem:[%s388 + $0x58] sm:$0xff] %vm1940, %v1917
      %1953 = vst.msk [vmem:[%s388 + $0x60] sm:$0xff] %vm1940, %v1922
      %1954 = vst.msk [vmem:[%s388 + $0x68] sm:$0xff] %vm1940, %v1927
      %1955 = vst.msk [vmem:[%s388 + $0x70] sm:$0xff] %vm1940, %v1932
      %1956 = vst.msk [vmem:[%s388 + $0x78] sm:$0xff] %vm1940, %v1937
      %s1957 = smul.u32 16, %s22
      %p1958 = scmp.lt.s32.totalorder %s1957, 31
      %s1959 = scalar_select %p1958, %s1957, 31
      %s1960 = smul.addr %s1959, 8
      %s1961 = scalar_lea.vmem %s11, %s1960
      // Predicated region
      $region65: #{qnet_forward.1} parent=63 // pred_check
        %p1962 = pneg %p276
      $region66: #{qnet_forward.1} parent=63 // pred_check_branch
        %1964 = sbr.rel (%p1962) target = $region68
      $region67: #{qnet_forward.1} parent=63 // pred_region
        %s1965 = smul.u32 16, %s22
      $region68: #{qnet_forward.1} parent=63 // pred_fallthru
        _
    $region64: #{qnet_forward.1} parent=5 // pred_fallthru
      _
    %p1966 = scmp.le.s32.totalorder 2, %s17
    // Predicated region
    $region69: #{qnet_forward.1} parent=5 // pred_check
      %p1967 = pneg %p1966
    $region70: #{qnet_forward.1} parent=5 // pred_check_branch
      %1969 = sbr.rel (%p1967) target = $region72
    $region71: #{qnet_forward.1} parent=5 // pred_region
      %s1970 = ssub.s32 %s17, 2
      // Predicated region
      $region73: #{qnet_forward.1} parent=71 // pred_check
        %p1971 = pneg %p282
      $region74: #{qnet_forward.1} parent=71 // pred_check_branch
        %1973 = sbr.rel (%p1971) target = $region76
      $region75: #{qnet_forward.1} parent=71 // pred_region
        %s1974 = smul.u32 16, %s23
        %p1975 = scmp.lt.s32.totalorder %s1974, 31
        %s1976 = scalar_select %p1975, %s1974, 31
        %s1977 = smul.addr %s1976, 8
        %s1978 = scalar_lea.vmem %s11, %s1977
      $region76: #{qnet_forward.1} parent=71 // pred_fallthru
        _
    $region72: #{qnet_forward.1} parent=5 // pred_fallthru
      _
  $region6: #{qnet_forward.1} parent=0 // loop_footer
    %s21 = sadd.s32 1, %s17
  $region7: #{qnet_forward.1} parent=0 // loop_footer_branch
    %16 = sbr.rel target = $region3
  $region8: #{qnet_forward.1} parent=0 // loop_exit
    _

</llo_original>
